<compile_context>
chip_gen: v6e
topology: v6e:2x2x1
jax: 0.10.0
libtpu: 0.0.40
codegen_flags: <defaults>
</compile_context>

<pallas_src>
import functools

import jax
import jax.numpy as jnp
from jax import lax
from jax.experimental import pallas as pl
from jax.experimental.pallas import tpu as pltpu


_LANE = 128
_SUBLANE = 8


def _round_up(x, m):
    return (x + m - 1) // m * m


def _pad2(a, rows, cols):
    """Zero-pad a 2-D array to (rows, cols)."""
    out = jnp.zeros((rows, cols), a.dtype)
    return out.at[: a.shape[0], : a.shape[1]].set(a)


def _fused_rnn_kernel(tok_ref, emb_ref, wih_ref, whh_ref, b_ref, wfc_ref, bfc_ref,
                      out_ref, seq_ref, gates_ref, *, T, B_pad, num_layers, num_classes):
    """Fused embedding -> L-layer tanh RNN -> fc -> softmax (single invocation).

    tok_ref:   (T*B_pad, 1) int32  time-major flattened tokens (row = t*B_pad + b)
    emb_ref:   (V_pad, P)  f32     zero-padded embedding table (row 0 = padding_idx)
    wih_ref:   (L, P, P)   f32     stacked zero-padded W_ih^T per layer
    whh_ref:   (L, P, P)   f32     stacked zero-padded W_hh^T per layer
    b_ref:     (L, 1, P)   f32     pre-summed (b_ih + b_hh), zero-padded
    wfc_ref:   (P, C_pad)  f32     zero-padded W_fc^T
    bfc_ref:   (1, C_pad)  f32
    out_ref:   (B_pad, C_pad) f32  softmax probabilities (padded class lanes = 0)
    seq_ref:   (T*B_pad, P) VMEM   inter-layer activation sequence
    gates_ref: (T*B_pad, P) VMEM   hoisted input projection for the current layer
    """
    TB, P = gates_ref.shape
    V_pad = emb_ref.shape[0]

    # Embedding lookup as a one-hot MXU matmul (gather-free, lane-aligned).
    lane_v = lax.broadcasted_iota(jnp.int32, (TB, V_pad), 1)
    onehot = (lane_v == tok_ref[...]).astype(jnp.float32)                 # (TB, V_pad)
    seq_ref[...] = jnp.dot(onehot, emb_ref[...],
                           preferred_element_type=jnp.float32)            # (TB, P)

    h = jnp.zeros((B_pad, P), jnp.float32)
    for l in range(num_layers):
        # Hoisted input projection + bias: ONE MXU call for the whole sequence.
        gates_ref[...] = (
            jnp.dot(seq_ref[...], wih_ref[l], preferred_element_type=jnp.float32)
            + b_ref[l]
        )
        whh = whh_ref[l]                                                   # (P, P)
        h = jnp.zeros((B_pad, P), jnp.float32)                             # h_0 = 0
        last_layer = (l == num_layers - 1)
        for t in range(T):                                                 # static unroll
            g_t = gates_ref[pl.ds(t * B_pad, B_pad), :]                    # (B_pad, P)
            h = jnp.tanh(g_t + jnp.dot(h, whh, preferred_element_type=jnp.float32))
            if not last_layer:
                # Only non-final layers need the full sequence (input to next layer).
                seq_ref[pl.ds(t * B_pad, B_pad), :] = h

    # fc + softmax over the true classes; padded class lanes masked out -> prob 0.
    logits = jnp.dot(h, wfc_ref[...], preferred_element_type=jnp.float32) + bfc_ref[...]
    lane_c = lax.broadcasted_iota(jnp.int32, logits.shape, 1)
    logits = jnp.where(lane_c < num_classes, logits, -1e30)
    m = jnp.max(logits, axis=1, keepdims=True)
    e = jnp.exp(logits - m)
    out_ref[...] = e / jnp.sum(e, axis=1, keepdims=True)


def rnn_model_forward(params, tokens):
    emb = params["embedding"]
    rnn = params["rnn"]
    w_fc, b_fc = params["fc_w"], params["fc_b"]

    B, T = tokens.shape
    vocab_size, vector_dim = emb.shape
    hidden_size = rnn[0][1].shape[0]
    num_layers = len(rnn)
    num_classes = w_fc.shape[0]

    P = _round_up(max(vector_dim, hidden_size), _LANE)
    V_pad = _round_up(vocab_size, _LANE)
    C_pad = _round_up(num_classes, _LANE)
    B_pad = _round_up(B, _SUBLANE)
    TB = T * B_pad

    # ---- wrapper-side weight prep: zero-pad to lane/sublane-aligned tiles ----
    emb_p = _pad2(emb, V_pad, P)
    wih_p = jnp.stack([_pad2(w_ih.T, P, P) for (w_ih, _, _, _) in rnn])         # (L,P,P)
    whh_p = jnp.stack([_pad2(w_hh.T, P, P) for (_, w_hh, _, _) in rnn])         # (L,P,P)
    b_p = jnp.stack([_pad2((b_ih + b_hh).reshape(1, -1), 1, P)
                     for (_, _, b_ih, b_hh) in rnn])                            # (L,1,P)
    wfc_p = _pad2(w_fc.T, P, C_pad)
    bfc_p = _pad2(b_fc.reshape(1, -1), 1, C_pad)

    # Time-major flattened tokens, batch padded to the sublane multiple (pad token = 0).
    tok_tm = jnp.zeros((T, B_pad), jnp.int32).at[:, :B].set(tokens.T.astype(jnp.int32))
    tok_flat = tok_tm.reshape(TB, 1)

    kernel = functools.partial(
        _fused_rnn_kernel, T=T, B_pad=B_pad,
        num_layers=num_layers, num_classes=num_classes)

    vmem = pl.BlockSpec(memory_space=pltpu.MemorySpace.VMEM)
    out = pl.pallas_call(
        kernel,
        out_shape=jax.ShapeDtypeStruct((B_pad, C_pad), jnp.float32),
        in_specs=[vmem] * 7,
        out_specs=vmem,
        scratch_shapes=[pltpu.VMEM((TB, P), jnp.float32),   # seq_ref
                        pltpu.VMEM((TB, P), jnp.float32)],  # gates_ref
    )(tok_flat, emb_p, wih_p, whh_p, b_p, wfc_p, bfc_p)
    return out[:B, :num_classes]


def rnn_model_reference(params, tokens):
    """Pure-JAX reference matching nn.Embedding + nn.RNN(batch_first) + fc + softmax."""
    x = params["embedding"][tokens]                        # (B, T, D)
    for (w_ih, w_hh, b_ih, b_hh) in params["rnn"]:
        B, T, _ = x.shape
        H = w_hh.shape[0]
        h = jnp.zeros((B, H), jnp.float32)
        outs = []
        for t in range(T):
            h = jnp.tanh(x[:, t, :] @ w_ih.T + b_ih + h @ w_hh.T + b_hh)
            outs.append(h)
        x = jnp.stack(outs, axis=1)                        # (B, T, H)
    logits = x[:, -1, :] @ params["fc_w"].T + params["fc_b"]
    return jax.nn.softmax(logits, axis=1)


def init_params(key, vocab_size, vector_dim, hidden_size, num_layers, num_classes):
    keys = jax.random.split(key, 3 + 4 * num_layers)
    emb = jax.random.normal(keys[0], (vocab_size, vector_dim), jnp.float32) * 0.1
    emb = emb.at[0].set(0.0)  # padding_idx=0
    params = {"embedding": emb}

    rnn = []
    kidx = 1
    bound = 1.0 / float(hidden_size) ** 0.5
    for layer in range(num_layers):
        d_in = vector_dim if layer == 0 else hidden_size
        w_ih = jax.random.uniform(keys[kidx], (hidden_size, d_in), jnp.float32, -bound, bound); kidx += 1
        w_hh = jax.random.uniform(keys[kidx], (hidden_size, hidden_size), jnp.float32, -bound, bound); kidx += 1
        b_ih = jax.random.uniform(keys[kidx], (hidden_size,), jnp.float32, -bound, bound); kidx += 1
        b_hh = jax.random.uniform(keys[kidx], (hidden_size,), jnp.float32, -bound, bound); kidx += 1
        rnn.append((w_ih, w_hh, b_ih, b_hh))
    params["rnn"] = rnn

    params["fc_w"] = jax.random.uniform(
        keys[kidx], (num_classes, hidden_size), jnp.float32, -bound, bound)
    params["fc_b"] = jax.random.uniform(
        keys[kidx + 1], (num_classes,), jnp.float32, -bound, bound)
    return params


if __name__ == "__main__":
    vocab_size = 30      # len(vocab)
    vector_dim = 16
    hidden_size = 32
    num_layers = 2
    num_classes = 5
    B, T = 2, 8

    key = jax.random.PRNGKey(0)
    pkey, xkey = jax.random.split(key)
    params = init_params(pkey, vocab_size, vector_dim, hidden_size, num_layers, num_classes)
    tokens = jax.random.randint(xkey, (B, T), 0, vocab_size, dtype=jnp.int32)

    forward = jax.jit(rnn_model_forward)
    y_pred = jax.block_until_ready(forward(params, tokens))

    assert y_pred.shape == (B, num_classes)
    assert jnp.allclose(jnp.sum(y_pred, axis=1), 1.0, atol=1e-5)

    # Correctness vs. pure-JAX reference (loose tol for MXU vs XLA f32 matmul paths).
    y_ref = rnn_model_reference(params, tokens)
    assert jnp.max(jnp.abs(y_pred - y_ref)) < 1e-2, (y_pred, y_ref)

    print("KERNEL_OK")
</pallas_src>

<mosaic_0001>
module attributes {stable_mosaic.version = 11 : i64} {
  func.func @_fused_rnn_kernel(%arg0: memref<64x1xi32, #tpu.memory_space<vmem>>, %arg1: memref<128x128xf32, #tpu.memory_space<vmem>>, %arg2: memref<2x128x128xf32, #tpu.memory_space<vmem>>, %arg3: memref<2x128x128xf32, #tpu.memory_space<vmem>>, %arg4: memref<2x1x128xf32, #tpu.memory_space<vmem>>, %arg5: memref<128x128xf32, #tpu.memory_space<vmem>>, %arg6: memref<1x128xf32, #tpu.memory_space<vmem>>, %arg7: memref<8x128xf32, #tpu.memory_space<vmem>>, %arg8: memref<64x128xf32, #tpu.memory_space<vmem>>, %arg9: memref<64x128xf32, #tpu.memory_space<vmem>>) attributes {dimension_semantics = [], scalar_prefetch = 0 : i64, scratch_operands = 2 : i64, tpu.core_type = #tpu.core_type<tc>} {
    %0 = tpu.iota {dimensions = array<i32: 1>} : vector<64x128xi32>
    %c0 = arith.constant 0 : index
    %c0_0 = arith.constant 0 : index
    %1 = vector.load %arg0[%c0, %c0_0] : memref<64x1xi32, #tpu.memory_space<vmem>>, vector<64x1xi32>
    %2 = vector.broadcast %1 : vector<64x1xi32> to vector<64x128xi32>
    %3 = arith.cmpi eq, %0, %2 : vector<64x128xi32>
    %4 = arith.extui %3 : vector<64x128xi1> to vector<64x128xi32>
    %5 = arith.sitofp %4 : vector<64x128xi32> to vector<64x128xf32>
    %c0_1 = arith.constant 0 : index
    %c0_2 = arith.constant 0 : index
    %6 = vector.load %arg1[%c0_1, %c0_2] : memref<128x128xf32, #tpu.memory_space<vmem>>, vector<128x128xf32>
    %cst = arith.constant dense<0.000000e+00> : vector<64x128xf32>
    %7 = tpu.matmul %5, %6, %cst {dimension_numbers = #tpu.dot_dimension_numbers<[1], [0], [0], [1], [0, 0, 1, 1], [], []>} : vector<64x128xf32>, vector<128x128xf32>, vector<64x128xf32> -> vector<64x128xf32>
    %c0_3 = arith.constant 0 : index
    %c0_4 = arith.constant 0 : index
    %8 = vector.load %arg8[%c0_3, %c0_4] : memref<64x128xf32, #tpu.memory_space<vmem>>, vector<64x128xf32>
    tpu.vector_store %arg8[%c0_3, %c0_4], %7 {strides = array<i32>} : memref<64x128xf32, #tpu.memory_space<vmem>>, vector<64x128xf32>,
    %c0_5 = arith.constant 0 : index
    %c0_6 = arith.constant 0 : index
    %9 = vector.load %arg8[%c0_5, %c0_6] : memref<64x128xf32, #tpu.memory_space<vmem>>, vector<64x128xf32>
    %c0_7 = arith.constant 0 : index
    %c0_8 = arith.constant 0 : index
    %c0_9 = arith.constant 0 : index
    %10 = vector.load %arg2[%c0_7, %c0_8, %c0_9] : memref<2x128x128xf32, #tpu.memory_space<vmem>>, vector<1x128x128xf32>
    %11 = vector.shape_cast %10 : vector<1x128x128xf32> to vector<128x128xf32>
    %cst_10 = arith.constant dense<0.000000e+00> : vector<64x128xf32>
    %12 = tpu.matmul %9, %11, %cst_10 {dimension_numbers = #tpu.dot_dimension_numbers<[1], [0], [0], [1], [0, 0, 1, 1], [], []>} : vector<64x128xf32>, vector<128x128xf32>, vector<64x128xf32> -> vector<64x128xf32>
    %c0_11 = arith.constant 0 : index
    %c0_12 = arith.constant 0 : index
    %c0_13 = arith.constant 0 : index
    %13 = vector.load %arg4[%c0_11, %c0_12, %c0_13] : memref<2x1x128xf32, #tpu.memory_space<vmem>>, vector<1x1x128xf32>
    %14 = vector.shape_cast %13 : vector<1x1x128xf32> to vector<1x128xf32>
    %15 = vector.broadcast %14 : vector<1x128xf32> to vector<64x128xf32>
    %16 = arith.addf %12, %15 : vector<64x128xf32>
    %c0_14 = arith.constant 0 : index
    %c0_15 = arith.constant 0 : index
    %17 = vector.load %arg9[%c0_14, %c0_15] : memref<64x128xf32, #tpu.memory_space<vmem>>, vector<64x128xf32>
    tpu.vector_store %arg9[%c0_14, %c0_15], %16 {strides = array<i32>} : memref<64x128xf32, #tpu.memory_space<vmem>>, vector<64x128xf32>,
    %c0_16 = arith.constant 0 : index
    %c0_17 = arith.constant 0 : index
    %c0_18 = arith.constant 0 : index
    %18 = vector.load %arg3[%c0_16, %c0_17, %c0_18] : memref<2x128x128xf32, #tpu.memory_space<vmem>>, vector<1x128x128xf32>
    %19 = vector.shape_cast %18 : vector<1x128x128xf32> to vector<128x128xf32>
    %cst_19 = arith.constant 0.000000e+00 : f32
    %20 = vector.broadcast %cst_19 : f32 to vector<8x128xf32>
    %c0_20 = arith.constant 0 : index
    %c0_21 = arith.constant 0 : index
    %21 = vector.load %arg9[%c0_20, %c0_21] : memref<64x128xf32, #tpu.memory_space<vmem>>, vector<8x128xf32>
    %cst_22 = arith.constant dense<0.000000e+00> : vector<8x128xf32>
    %22 = tpu.matmul %20, %19, %cst_22 {dimension_numbers = #tpu.dot_dimension_numbers<[1], [0], [0], [1], [0, 0, 1, 1], [], []>} : vector<8x128xf32>, vector<128x128xf32>, vector<8x128xf32> -> vector<8x128xf32>
    %23 = arith.addf %21, %22 : vector<8x128xf32>
    %24 = math.tanh %23 : vector<8x128xf32>
    %c0_23 = arith.constant 0 : index
    %c0_24 = arith.constant 0 : index
    %25 = vector.load %arg8[%c0_23, %c0_24] : memref<64x128xf32, #tpu.memory_space<vmem>>, vector<8x128xf32>
    tpu.vector_store %arg8[%c0_23, %c0_24], %24 {strides = array<i32>} : memref<64x128xf32, #tpu.memory_space<vmem>>, vector<8x128xf32>,
    %c8 = arith.constant 8 : index
    %c0_25 = arith.constant 0 : index
    %26 = vector.load %arg9[%c8, %c0_25] : memref<64x128xf32, #tpu.memory_space<vmem>>, vector<8x128xf32>
    %cst_26 = arith.constant dense<0.000000e+00> : vector<8x128xf32>
    %27 = tpu.matmul %24, %19, %cst_26 {dimension_numbers = #tpu.dot_dimension_numbers<[1], [0], [0], [1], [0, 0, 1, 1], [], []>} : vector<8x128xf32>, vector<128x128xf32>, vector<8x128xf32> -> vector<8x128xf32>
    %28 = arith.addf %26, %27 : vector<8x128xf32>
    %29 = math.tanh %28 : vector<8x128xf32>
    %c8_27 = arith.constant 8 : index
    %c0_28 = arith.constant 0 : index
    %30 = vector.load %arg8[%c8_27, %c0_28] : memref<64x128xf32, #tpu.memory_space<vmem>>, vector<8x128xf32>
    tpu.vector_store %arg8[%c8_27, %c0_28], %29 {strides = array<i32>} : memref<64x128xf32, #tpu.memory_space<vmem>>, vector<8x128xf32>,
    %c16 = arith.constant 16 : index
    %c0_29 = arith.constant 0 : index
    %31 = vector.load %arg9[%c16, %c0_29] : memref<64x128xf32, #tpu.memory_space<vmem>>, vector<8x128xf32>
    %cst_30 = arith.constant dense<0.000000e+00> : vector<8x128xf32>
    %32 = tpu.matmul %29, %19, %cst_30 {dimension_numbers = #tpu.dot_dimension_numbers<[1], [0], [0], [1], [0, 0, 1, 1], [], []>} : vector<8x128xf32>, vector<128x128xf32>, vector<8x128xf32> -> vector<8x128xf32>
    %33 = arith.addf %31, %32 : vector<8x128xf32>
    %34 = math.tanh %33 : vector<8x128xf32>
    %c16_31 = arith.constant 16 : index
    %c0_32 = arith.constant 0 : index
    %35 = vector.load %arg8[%c16_31, %c0_32] : memref<64x128xf32, #tpu.memory_space<vmem>>, vector<8x128xf32>
    tpu.vector_store %arg8[%c16_31, %c0_32], %34 {strides = array<i32>} : memref<64x128xf32, #tpu.memory_space<vmem>>, vector<8x128xf32>,
    %c24 = arith.constant 24 : index
    %c0_33 = arith.constant 0 : index
    %36 = vector.load %arg9[%c24, %c0_33] : memref<64x128xf32, #tpu.memory_space<vmem>>, vector<8x128xf32>
    %cst_34 = arith.constant dense<0.000000e+00> : vector<8x128xf32>
    %37 = tpu.matmul %34, %19, %cst_34 {dimension_numbers = #tpu.dot_dimension_numbers<[1], [0], [0], [1], [0, 0, 1, 1], [], []>} : vector<8x128xf32>, vector<128x128xf32>, vector<8x128xf32> -> vector<8x128xf32>
    %38 = arith.addf %36, %37 : vector<8x128xf32>
    %39 = math.tanh %38 : vector<8x128xf32>
    %c24_35 = arith.constant 24 : index
    %c0_36 = arith.constant 0 : index
    %40 = vector.load %arg8[%c24_35, %c0_36] : memref<64x128xf32, #tpu.memory_space<vmem>>, vector<8x128xf32>
    tpu.vector_store %arg8[%c24_35, %c0_36], %39 {strides = array<i32>} : memref<64x128xf32, #tpu.memory_space<vmem>>, vector<8x128xf32>,
    %c32 = arith.constant 32 : index
    %c0_37 = arith.constant 0 : index
    %41 = vector.load %arg9[%c32, %c0_37] : memref<64x128xf32, #tpu.memory_space<vmem>>, vector<8x128xf32>
    %cst_38 = arith.constant dense<0.000000e+00> : vector<8x128xf32>
    %42 = tpu.matmul %39, %19, %cst_38 {dimension_numbers = #tpu.dot_dimension_numbers<[1], [0], [0], [1], [0, 0, 1, 1], [], []>} : vector<8x128xf32>, vector<128x128xf32>, vector<8x128xf32> -> vector<8x128xf32>
    %43 = arith.addf %41, %42 : vector<8x128xf32>
    %44 = math.tanh %43 : vector<8x128xf32>
    %c32_39 = arith.constant 32 : index
    %c0_40 = arith.constant 0 : index
    %45 = vector.load %arg8[%c32_39, %c0_40] : memref<64x128xf32, #tpu.memory_space<vmem>>, vector<8x128xf32>
    tpu.vector_store %arg8[%c32_39, %c0_40], %44 {strides = array<i32>} : memref<64x128xf32, #tpu.memory_space<vmem>>, vector<8x128xf32>,
    %c40 = arith.constant 40 : index
    %c0_41 = arith.constant 0 : index
    %46 = vector.load %arg9[%c40, %c0_41] : memref<64x128xf32, #tpu.memory_space<vmem>>, vector<8x128xf32>
    %cst_42 = arith.constant dense<0.000000e+00> : vector<8x128xf32>
    %47 = tpu.matmul %44, %19, %cst_42 {dimension_numbers = #tpu.dot_dimension_numbers<[1], [0], [0], [1], [0, 0, 1, 1], [], []>} : vector<8x128xf32>, vector<128x128xf32>, vector<8x128xf32> -> vector<8x128xf32>
    %48 = arith.addf %46, %47 : vector<8x128xf32>
    %49 = math.tanh %48 : vector<8x128xf32>
    %c40_43 = arith.constant 40 : index
    %c0_44 = arith.constant 0 : index
    %50 = vector.load %arg8[%c40_43, %c0_44] : memref<64x128xf32, #tpu.memory_space<vmem>>, vector<8x128xf32>
    tpu.vector_store %arg8[%c40_43, %c0_44], %49 {strides = array<i32>} : memref<64x128xf32, #tpu.memory_space<vmem>>, vector<8x128xf32>,
    %c48 = arith.constant 48 : index
    %c0_45 = arith.constant 0 : index
    %51 = vector.load %arg9[%c48, %c0_45] : memref<64x128xf32, #tpu.memory_space<vmem>>, vector<8x128xf32>
    %cst_46 = arith.constant dense<0.000000e+00> : vector<8x128xf32>
    %52 = tpu.matmul %49, %19, %cst_46 {dimension_numbers = #tpu.dot_dimension_numbers<[1], [0], [0], [1], [0, 0, 1, 1], [], []>} : vector<8x128xf32>, vector<128x128xf32>, vector<8x128xf32> -> vector<8x128xf32>
    %53 = arith.addf %51, %52 : vector<8x128xf32>
    %54 = math.tanh %53 : vector<8x128xf32>
    %c48_47 = arith.constant 48 : index
    %c0_48 = arith.constant 0 : index
    %55 = vector.load %arg8[%c48_47, %c0_48] : memref<64x128xf32, #tpu.memory_space<vmem>>, vector<8x128xf32>
    tpu.vector_store %arg8[%c48_47, %c0_48], %54 {strides = array<i32>} : memref<64x128xf32, #tpu.memory_space<vmem>>, vector<8x128xf32>,
    %c56 = arith.constant 56 : index
    %c0_49 = arith.constant 0 : index
    %56 = vector.load %arg9[%c56, %c0_49] : memref<64x128xf32, #tpu.memory_space<vmem>>, vector<8x128xf32>
    %cst_50 = arith.constant dense<0.000000e+00> : vector<8x128xf32>
    %57 = tpu.matmul %54, %19, %cst_50 {dimension_numbers = #tpu.dot_dimension_numbers<[1], [0], [0], [1], [0, 0, 1, 1], [], []>} : vector<8x128xf32>, vector<128x128xf32>, vector<8x128xf32> -> vector<8x128xf32>
    %58 = arith.addf %56, %57 : vector<8x128xf32>
    %59 = math.tanh %58 : vector<8x128xf32>
    %c56_51 = arith.constant 56 : index
    %c0_52 = arith.constant 0 : index
    %60 = vector.load %arg8[%c56_51, %c0_52] : memref<64x128xf32, #tpu.memory_space<vmem>>, vector<8x128xf32>
    tpu.vector_store %arg8[%c56_51, %c0_52], %59 {strides = array<i32>} : memref<64x128xf32, #tpu.memory_space<vmem>>, vector<8x128xf32>,
    %c0_53 = arith.constant 0 : index
    %c0_54 = arith.constant 0 : index
    %61 = vector.load %arg8[%c0_53, %c0_54] : memref<64x128xf32, #tpu.memory_space<vmem>>, vector<64x128xf32>
    %c1 = arith.constant 1 : index
    %c0_55 = arith.constant 0 : index
    %c0_56 = arith.constant 0 : index
    %62 = vector.load %arg2[%c1, %c0_55, %c0_56] : memref<2x128x128xf32, #tpu.memory_space<vmem>>, vector<1x128x128xf32>
    %63 = vector.shape_cast %62 : vector<1x128x128xf32> to vector<128x128xf32>
    %cst_57 = arith.constant dense<0.000000e+00> : vector<64x128xf32>
    %64 = tpu.matmul %61, %63, %cst_57 {dimension_numbers = #tpu.dot_dimension_numbers<[1], [0], [0], [1], [0, 0, 1, 1], [], []>} : vector<64x128xf32>, vector<128x128xf32>, vector<64x128xf32> -> vector<64x128xf32>
    %c1_58 = arith.constant 1 : index
    %c0_59 = arith.constant 0 : index
    %c0_60 = arith.constant 0 : index
    %65 = vector.load %arg4[%c1_58, %c0_59, %c0_60] : memref<2x1x128xf32, #tpu.memory_space<vmem>>, vector<1x1x128xf32>
    %66 = vector.shape_cast %65 : vector<1x1x128xf32> to vector<1x128xf32>
    %67 = vector.broadcast %66 : vector<1x128xf32> to vector<64x128xf32>
    %68 = arith.addf %64, %67 : vector<64x128xf32>
    %c0_61 = arith.constant 0 : index
    %c0_62 = arith.constant 0 : index
    %69 = vector.load %arg9[%c0_61, %c0_62] : memref<64x128xf32, #tpu.memory_space<vmem>>, vector<64x128xf32>
    tpu.vector_store %arg9[%c0_61, %c0_62], %68 {strides = array<i32>} : memref<64x128xf32, #tpu.memory_space<vmem>>, vector<64x128xf32>,
    %c1_63 = arith.constant 1 : index
    %c0_64 = arith.constant 0 : index
    %c0_65 = arith.constant 0 : index
    %70 = vector.load %arg3[%c1_63, %c0_64, %c0_65] : memref<2x128x128xf32, #tpu.memory_space<vmem>>, vector<1x128x128xf32>
    %71 = vector.shape_cast %70 : vector<1x128x128xf32> to vector<128x128xf32>
    %cst_66 = arith.constant 0.000000e+00 : f32
    %72 = vector.broadcast %cst_66 : f32 to vector<8x128xf32>
    %c0_67 = arith.constant 0 : index
    %c0_68 = arith.constant 0 : index
    %73 = vector.load %arg9[%c0_67, %c0_68] : memref<64x128xf32, #tpu.memory_space<vmem>>, vector<8x128xf32>
    %cst_69 = arith.constant dense<0.000000e+00> : vector<8x128xf32>
    %74 = tpu.matmul %72, %71, %cst_69 {dimension_numbers = #tpu.dot_dimension_numbers<[1], [0], [0], [1], [0, 0, 1, 1], [], []>} : vector<8x128xf32>, vector<128x128xf32>, vector<8x128xf32> -> vector<8x128xf32>
    %75 = arith.addf %73, %74 : vector<8x128xf32>
    %76 = math.tanh %75 : vector<8x128xf32>
    %c8_70 = arith.constant 8 : index
    %c0_71 = arith.constant 0 : index
    %77 = vector.load %arg9[%c8_70, %c0_71] : memref<64x128xf32, #tpu.memory_space<vmem>>, vector<8x128xf32>
    %cst_72 = arith.constant dense<0.000000e+00> : vector<8x128xf32>
    %78 = tpu.matmul %76, %71, %cst_72 {dimension_numbers = #tpu.dot_dimension_numbers<[1], [0], [0], [1], [0, 0, 1, 1], [], []>} : vector<8x128xf32>, vector<128x128xf32>, vector<8x128xf32> -> vector<8x128xf32>
    %79 = arith.addf %77, %78 : vector<8x128xf32>
    %80 = math.tanh %79 : vector<8x128xf32>
    %c16_73 = arith.constant 16 : index
    %c0_74 = arith.constant 0 : index
    %81 = vector.load %arg9[%c16_73, %c0_74] : memref<64x128xf32, #tpu.memory_space<vmem>>, vector<8x128xf32>
    %cst_75 = arith.constant dense<0.000000e+00> : vector<8x128xf32>
    %82 = tpu.matmul %80, %71, %cst_75 {dimension_numbers = #tpu.dot_dimension_numbers<[1], [0], [0], [1], [0, 0, 1, 1], [], []>} : vector<8x128xf32>, vector<128x128xf32>, vector<8x128xf32> -> vector<8x128xf32>
    %83 = arith.addf %81, %82 : vector<8x128xf32>
    %84 = math.tanh %83 : vector<8x128xf32>
    %c24_76 = arith.constant 24 : index
    %c0_77 = arith.constant 0 : index
    %85 = vector.load %arg9[%c24_76, %c0_77] : memref<64x128xf32, #tpu.memory_space<vmem>>, vector<8x128xf32>
    %cst_78 = arith.constant dense<0.000000e+00> : vector<8x128xf32>
    %86 = tpu.matmul %84, %71, %cst_78 {dimension_numbers = #tpu.dot_dimension_numbers<[1], [0], [0], [1], [0, 0, 1, 1], [], []>} : vector<8x128xf32>, vector<128x128xf32>, vector<8x128xf32> -> vector<8x128xf32>
    %87 = arith.addf %85, %86 : vector<8x128xf32>
    %88 = math.tanh %87 : vector<8x128xf32>
    %c32_79 = arith.constant 32 : index
    %c0_80 = arith.constant 0 : index
    %89 = vector.load %arg9[%c32_79, %c0_80] : memref<64x128xf32, #tpu.memory_space<vmem>>, vector<8x128xf32>
    %cst_81 = arith.constant dense<0.000000e+00> : vector<8x128xf32>
    %90 = tpu.matmul %88, %71, %cst_81 {dimension_numbers = #tpu.dot_dimension_numbers<[1], [0], [0], [1], [0, 0, 1, 1], [], []>} : vector<8x128xf32>, vector<128x128xf32>, vector<8x128xf32> -> vector<8x128xf32>
    %91 = arith.addf %89, %90 : vector<8x128xf32>
    %92 = math.tanh %91 : vector<8x128xf32>
    %c40_82 = arith.constant 40 : index
    %c0_83 = arith.constant 0 : index
    %93 = vector.load %arg9[%c40_82, %c0_83] : memref<64x128xf32, #tpu.memory_space<vmem>>, vector<8x128xf32>
    %cst_84 = arith.constant dense<0.000000e+00> : vector<8x128xf32>
    %94 = tpu.matmul %92, %71, %cst_84 {dimension_numbers = #tpu.dot_dimension_numbers<[1], [0], [0], [1], [0, 0, 1, 1], [], []>} : vector<8x128xf32>, vector<128x128xf32>, vector<8x128xf32> -> vector<8x128xf32>
    %95 = arith.addf %93, %94 : vector<8x128xf32>
    %96 = math.tanh %95 : vector<8x128xf32>
    %c48_85 = arith.constant 48 : index
    %c0_86 = arith.constant 0 : index
    %97 = vector.load %arg9[%c48_85, %c0_86] : memref<64x128xf32, #tpu.memory_space<vmem>>, vector<8x128xf32>
    %cst_87 = arith.constant dense<0.000000e+00> : vector<8x128xf32>
    %98 = tpu.matmul %96, %71, %cst_87 {dimension_numbers = #tpu.dot_dimension_numbers<[1], [0], [0], [1], [0, 0, 1, 1], [], []>} : vector<8x128xf32>, vector<128x128xf32>, vector<8x128xf32> -> vector<8x128xf32>
    %99 = arith.addf %97, %98 : vector<8x128xf32>
    %100 = math.tanh %99 : vector<8x128xf32>
    %c56_88 = arith.constant 56 : index
    %c0_89 = arith.constant 0 : index
    %101 = vector.load %arg9[%c56_88, %c0_89] : memref<64x128xf32, #tpu.memory_space<vmem>>, vector<8x128xf32>
    %cst_90 = arith.constant dense<0.000000e+00> : vector<8x128xf32>
    %102 = tpu.matmul %100, %71, %cst_90 {dimension_numbers = #tpu.dot_dimension_numbers<[1], [0], [0], [1], [0, 0, 1, 1], [], []>} : vector<8x128xf32>, vector<128x128xf32>, vector<8x128xf32> -> vector<8x128xf32>
    %103 = arith.addf %101, %102 : vector<8x128xf32>
    %104 = math.tanh %103 : vector<8x128xf32>
    %c0_91 = arith.constant 0 : index
    %c0_92 = arith.constant 0 : index
    %105 = vector.load %arg5[%c0_91, %c0_92] : memref<128x128xf32, #tpu.memory_space<vmem>>, vector<128x128xf32>
    %cst_93 = arith.constant dense<0.000000e+00> : vector<8x128xf32>
    %106 = tpu.matmul %104, %105, %cst_93 {dimension_numbers = #tpu.dot_dimension_numbers<[1], [0], [0], [1], [0, 0, 1, 1], [], []>} : vector<8x128xf32>, vector<128x128xf32>, vector<8x128xf32> -> vector<8x128xf32>
    %c0_94 = arith.constant 0 : index
    %c0_95 = arith.constant 0 : index
    %107 = vector.load %arg6[%c0_94, %c0_95] : memref<1x128xf32, #tpu.memory_space<vmem>>, vector<1x128xf32>
    %108 = vector.broadcast %107 : vector<1x128xf32> to vector<8x128xf32>
    %109 = arith.addf %106, %108 : vector<8x128xf32>
    %110 = tpu.iota {dimensions = array<i32: 1>} : vector<8x128xi32>
    %c5_i32 = arith.constant 5 : i32
    %111 = vector.broadcast %c5_i32 : i32 to vector<8x128xi32>
    %112 = arith.cmpi slt, %110, %111 : vector<8x128xi32>
    %cst_96 = arith.constant -1.000000e+30 : f32
    %113 = vector.broadcast %cst_96 : f32 to vector<8x128xf32>
    %114 = arith.select %112, %109, %113 : vector<8x128xi1>, vector<8x128xf32>
    %cst_97 = arith.constant dense<0xFF800000> : vector<8xf32>
    %115 = vector.multi_reduction <maximumf>, %114, %cst_97 [1] : vector<8x128xf32> to vector<8xf32>
    %116 = vector.shape_cast %115 : vector<8xf32> to vector<8x1xf32>
    %117 = vector.broadcast %116 : vector<8x1xf32> to vector<8x128xf32>
    %118 = arith.subf %114, %117 : vector<8x128xf32>
    %119 = math.exp %118 : vector<8x128xf32>
    %cst_98 = arith.constant dense<0.000000e+00> : vector<8xf32>
    %120 = vector.multi_reduction <add>, %119, %cst_98 [1] : vector<8x128xf32> to vector<8xf32>
    %121 = vector.shape_cast %120 : vector<8xf32> to vector<8x1xf32>
    %122 = vector.broadcast %121 : vector<8x1xf32> to vector<8x128xf32>
    %123 = arith.divf %119, %122 : vector<8x128xf32>
    %c0_99 = arith.constant 0 : index
    %c0_100 = arith.constant 0 : index
    %124 = vector.load %arg7[%c0_99, %c0_100] : memref<8x128xf32, #tpu.memory_space<vmem>>, vector<8x128xf32>
    tpu.vector_store %arg7[%c0_99, %c0_100], %123 {strides = array<i32>} : memref<8x128xf32, #tpu.memory_space<vmem>>, vector<8x128xf32>,
    return
  }
}

</mosaic_0001>

<llo_original>
// kernel: rnn_model_forward.1
$region0: #{rnn_model_forward.1}
  #allocation0 [shape = 'u32[]', space=smem, size = 0x4, offset = 0x4, fixed_abs, tag = 'smem constant byte address 0x4 - core index']
  #allocation1 [shape = 'u32[144,128]{1,0:T(1,128)}', space=vmem, size = 0x12000, scoped, tag = 'internal scratch']
  #allocation2 [shape = 'f32[64,128]{1,0:T(8,128)}', space=vmem, size = 0x8000, scoped, tag = 'scratch operand']
  #allocation3 [shape = 'f32[64,128]{1,0:T(8,128)}', space=vmem, size = 0x8000, scoped, tag = 'scratch operand']
  %s0 = inlined_call_operand.vmem [shape: s32[64,1], index: 0, kind: input, shape index: {}]
  %s1 = inlined_call_operand.vmem [shape: f32[128,128], index: 1, kind: input, shape index: {}]
  %s2 = inlined_call_operand.vmem [shape: f32[2,128,128], index: 2, kind: input, shape index: {}]
  %s3 = inlined_call_operand.vmem [shape: f32[2,128,128], index: 3, kind: input, shape index: {}]
  %s4 = inlined_call_operand.vmem [shape: f32[2,1,128], index: 4, kind: input, shape index: {}]
  %s5 = inlined_call_operand.vmem [shape: f32[128,128], index: 5, kind: input, shape index: {}]
  %s6 = inlined_call_operand.vmem [shape: f32[1,128], index: 6, kind: input, shape index: {}]
  %s7 = inlined_call_operand.vmem [shape: f32[8,128], index: 7, kind: output, shape index: {}]
  %s8 = sld [smem:[#allocation0]]
  $region38: #{rnn_model_forward.1} parent=0
    _
  %s10 = ssub.s32 1, %s8
  %s11 = scalar_select 0, %s10, %s8
  // Predicated region
  $region2: #{rnn_model_forward.1} parent=0 // pred_check
    _
  $region3: #{rnn_model_forward.1} parent=0 // pred_check_branch
    %13 = sbr.rel (0) target = $region5
  $region4: #{rnn_model_forward.1} parent=0 // pred_region
    _
  $region5: #{rnn_model_forward.1} parent=0 // pred_fallthru
    _
  // Predicated region
  $region6: #{rnn_model_forward.1} parent=0 // pred_check
    _
  $region7: #{rnn_model_forward.1} parent=0 // pred_check_branch
    %15 = sbr.rel (0) target = $region9
  $region8: #{rnn_model_forward.1} parent=0 // pred_region
    _
  $region9: #{rnn_model_forward.1} parent=0 // pred_fallthru
    _
  // Predicated region
  $region10: #{rnn_model_forward.1} parent=0 // pred_check
    _
  $region11: #{rnn_model_forward.1} parent=0 // pred_check_branch
    %17 = sbr.rel (0) target = $region13
  $region12: #{rnn_model_forward.1} parent=0 // pred_region
    _
  $region13: #{rnn_model_forward.1} parent=0 // pred_fallthru
    _
  // Predicated region
  $region14: #{rnn_model_forward.1} parent=0 // pred_check
    _
  $region15: #{rnn_model_forward.1} parent=0 // pred_check_branch
    %19 = sbr.rel (0) target = $region17
  $region16: #{rnn_model_forward.1} parent=0 // pred_region
    _
  $region17: #{rnn_model_forward.1} parent=0 // pred_fallthru
    _
  // Predicated region
  $region18: #{rnn_model_forward.1} parent=0 // pred_check
    _
  $region19: #{rnn_model_forward.1} parent=0 // pred_check_branch
    %21 = sbr.rel (0) target = $region21
  $region20: #{rnn_model_forward.1} parent=0 // pred_region
    _
  $region21: #{rnn_model_forward.1} parent=0 // pred_fallthru
    _
  // Predicated region
  $region22: #{rnn_model_forward.1} parent=0 // pred_check
    _
  $region23: #{rnn_model_forward.1} parent=0 // pred_check_branch
    %23 = sbr.rel (0) target = $region25
  $region24: #{rnn_model_forward.1} parent=0 // pred_region
    _
  $region25: #{rnn_model_forward.1} parent=0 // pred_fallthru
    _
  // Predicated region
  $region26: #{rnn_model_forward.1} parent=0 // pred_check
    _
  $region27: #{rnn_model_forward.1} parent=0 // pred_check_branch
    %25 = sbr.rel (0) target = $region29
  $region28: #{rnn_model_forward.1} parent=0 // pred_region
    _
  $region29: #{rnn_model_forward.1} parent=0 // pred_fallthru
    _
  %v26 = vlaneseq
  %v27 = vand.u32 %v26, 127
  %v28 = vld [vmem:[%s0] sm:$0xff]
  %v29 = vld [vmem:[%s0 + $0x8] sm:$0xff]
  %v30 = vld [vmem:[%s0 + $0x10] sm:$0xff]
  %v31 = vld [vmem:[%s0 + $0x18] sm:$0xff]
  %v32 = vld [vmem:[%s0 + $0x20] sm:$0xff]
  %v33 = vld [vmem:[%s0 + $0x28] sm:$0xff]
  %v34 = vld [vmem:[%s0 + $0x30] sm:$0xff]
  %v35 = vld [vmem:[%s0 + $0x38] sm:$0xff]
  %36 = vset.pattern.permute.xlu0 0
  %37 = vperm.xlu0 %36, %v28
  %v38 = vpop.permute.xlu0 %37
  %39 = vset.pattern.permute.xlu0 0
  %40 = vperm.xlu0 %39, %v29
  %v41 = vpop.permute.xlu0 %40
  %42 = vset.pattern.permute.xlu0 0
  %43 = vperm.xlu0 %42, %v30
  %v44 = vpop.permute.xlu0 %43
  %45 = vset.pattern.permute.xlu0 0
  %46 = vperm.xlu0 %45, %v31
  %v47 = vpop.permute.xlu0 %46
  %48 = vset.pattern.permute.xlu0 0
  %49 = vperm.xlu0 %48, %v32
  %v50 = vpop.permute.xlu0 %49
  %51 = vset.pattern.permute.xlu0 0
  %52 = vperm.xlu0 %51, %v33
  %v53 = vpop.permute.xlu0 %52
  %54 = vset.pattern.permute.xlu0 0
  %55 = vperm.xlu0 %54, %v34
  %v56 = vpop.permute.xlu0 %55
  %57 = vset.pattern.permute.xlu0 0
  %58 = vperm.xlu0 %57, %v35
  %v59 = vpop.permute.xlu0 %58
  %vm60 = vcmp.eq.s32.totalorder %v27, %v38
  %vm61 = vcmp.eq.s32.totalorder %v27, %v41
  %vm62 = vcmp.eq.s32.totalorder %v27, %v44
  %vm63 = vcmp.eq.s32.totalorder %v27, %v47
  %vm64 = vcmp.eq.s32.totalorder %v27, %v50
  %vm65 = vcmp.eq.s32.totalorder %v27, %v53
  %vm66 = vcmp.eq.s32.totalorder %v27, %v56
  %vm67 = vcmp.eq.s32.totalorder %v27, %v59
  %v68 = vsel %vm60, 1, 0
  %v69 = vsel %vm61, 1, 0
  %v70 = vsel %vm62, 1, 0
  %v71 = vsel %vm63, 1, 0
  %v72 = vsel %vm64, 1, 0
  %v73 = vsel %vm65, 1, 0
  %v74 = vsel %vm66, 1, 0
  %v75 = vsel %vm67, 1, 0
  %v76 = vcvt.s32.f32 %v68
  %v77 = vcvt.s32.f32 %v69
  %v78 = vcvt.s32.f32 %v70
  %v79 = vcvt.s32.f32 %v71
  %v80 = vcvt.s32.f32 %v72
  %v81 = vcvt.s32.f32 %v73
  %v82 = vcvt.s32.f32 %v74
  %v83 = vcvt.s32.f32 %v75
  %v84 = vld [vmem:[%s1] sm:$0xff]
  %v85 = vld [vmem:[%s1 + $0x8] sm:$0xff]
  %v86 = vld [vmem:[%s1 + $0x10] sm:$0xff]
  %v87 = vld [vmem:[%s1 + $0x18] sm:$0xff]
  %v88 = vld [vmem:[%s1 + $0x20] sm:$0xff]
  %v89 = vld [vmem:[%s1 + $0x28] sm:$0xff]
  %v90 = vld [vmem:[%s1 + $0x30] sm:$0xff]
  %v91 = vld [vmem:[%s1 + $0x38] sm:$0xff]
  %v92 = vld [vmem:[%s1 + $0x40] sm:$0xff]
  %v93 = vld [vmem:[%s1 + $0x48] sm:$0xff]
  %v94 = vld [vmem:[%s1 + $0x50] sm:$0xff]
  %v95 = vld [vmem:[%s1 + $0x58] sm:$0xff]
  %v96 = vld [vmem:[%s1 + $0x60] sm:$0xff]
  %v97 = vld [vmem:[%s1 + $0x68] sm:$0xff]
  %v98 = vld [vmem:[%s1 + $0x70] sm:$0xff]
  %v99 = vld [vmem:[%s1 + $0x78] sm:$0xff]
  %100 = vmatprep.subr.mxu0 0.0
  %101 = vmatpush1.msra.mxu0 %v99
  %102 = vmatprep.subr.mxu0 0.0
  %103 = vmatpush1.msra.mxu0 %v98
  %104 = vmatprep.subr.mxu0 0.0
  %105 = vmatpush1.msra.mxu0 %v97
  %106 = vmatprep.subr.mxu0 0.0
  %107 = vmatpush1.msra.mxu0 %v96
  %108 = vmatprep.subr.mxu0 0.0
  %109 = vmatpush1.msra.mxu0 %v95
  %110 = vmatprep.subr.mxu0 0.0
  %111 = vmatpush1.msra.mxu0 %v94
  %112 = vmatprep.subr.mxu0 0.0
  %113 = vmatpush1.msra.mxu0 %v93
  %114 = vmatprep.subr.mxu0 0.0
  %115 = vmatpush1.msra.mxu0 %v92
  %116 = vmatprep.subr.mxu0 0.0
  %117 = vmatpush1.msra.mxu0 %v91
  %118 = vmatprep.subr.mxu0 0.0
  %119 = vmatpush1.msra.mxu0 %v90
  %120 = vmatprep.subr.mxu0 0.0
  %121 = vmatpush1.msra.mxu0 %v89
  %122 = vmatprep.subr.mxu0 0.0
  %123 = vmatpush1.msra.mxu0 %v88
  %124 = vmatprep.subr.mxu0 0.0
  %125 = vmatpush1.msra.mxu0 %v87
  %126 = vmatprep.subr.mxu0 0.0
  %127 = vmatpush1.msra.mxu0 %v86
  %128 = vmatprep.subr.mxu0 0.0
  %129 = vmatpush1.msra.mxu0 %v85
  %130 = vmatprep.subr.mxu0 0.0
  %131 = vmatpush1.msra.mxu0 %v84
  %132 = vmatprep.subr.mxu0 0.0
  %133 = vmatpush2.msra.mxu0 0.0
  %134 = vmatprep.subr.mxu0 0.0
  %135 = vmatpush2.msra.mxu0 0.0
  %136 = vmatprep.subr.mxu0 0.0
  %137 = vmatpush2.msra.mxu0 0.0
  %138 = vmatprep.subr.mxu0 0.0
  %139 = vmatpush2.msra.mxu0 0.0
  %140 = vmatprep.subr.mxu0 0.0
  %141 = vmatpush2.msra.mxu0 0.0
  %142 = vmatprep.subr.mxu0 0.0
  %143 = vmatpush2.msra.mxu0 0.0
  %144 = vmatprep.subr.mxu0 0.0
  %145 = vmatpush2.msra.mxu0 0.0
  %146 = vmatprep.subr.mxu0 0.0
  %147 = vmatpush2.msra.mxu0 0.0
  %148 = vmatprep.subr.mxu0 0.0
  %149 = vmatpush2.msra.mxu0 0.0
  %150 = vmatprep.subr.mxu0 0.0
  %151 = vmatpush2.msra.mxu0 0.0
  %152 = vmatprep.subr.mxu0 0.0
  %153 = vmatpush2.msra.mxu0 0.0
  %154 = vmatprep.subr.mxu0 0.0
  %155 = vmatpush2.msra.mxu0 0.0
  %156 = vmatprep.subr.mxu0 0.0
  %157 = vmatpush2.msra.mxu0 0.0
  %158 = vmatprep.subr.mxu0 0.0
  %159 = vmatpush2.msra.mxu0 0.0
  %160 = vmatprep.subr.mxu0 0.0
  %161 = vmatpush2.msra.mxu0 0.0
  %162 = vmatprep.subr.mxu0 0.0
  %163 = vmatpush2.msra.mxu0 0.0
  %164 = vmatprep.mubr.f32.mxu0 0.0
  %165 = vmatmul.mubr.f32.gmra.mxu0 %v76
  %v166 = vpop.f32.mrf.mxu0
  %v167 = vadd.f32 0.0, %v166
  %v168 = vpop.f32.mrf.mxu0
  %169 = vmatprep.mubr.f32.mxu0 0.0
  %170 = vmatmul.mubr.f32.gmra.mxu0 %v77
  %v171 = vpop.f32.mrf.mxu0
  %v172 = vadd.f32 0.0, %v171
  %v173 = vpop.f32.mrf.mxu0
  %174 = vmatprep.mubr.f32.mxu0 0.0
  %175 = vmatmul.mubr.f32.gmra.mxu0 %v78
  %v176 = vpop.f32.mrf.mxu0
  %v177 = vadd.f32 0.0, %v176
  %v178 = vpop.f32.mrf.mxu0
  %179 = vmatprep.mubr.f32.mxu0 0.0
  %180 = vmatmul.mubr.f32.gmra.mxu0 %v79
  %v181 = vpop.f32.mrf.mxu0
  %v182 = vadd.f32 0.0, %v181
  %v183 = vpop.f32.mrf.mxu0
  %184 = vmatprep.mubr.f32.mxu0 0.0
  %185 = vmatmul.mubr.f32.gmra.mxu0 %v80
  %v186 = vpop.f32.mrf.mxu0
  %v187 = vadd.f32 0.0, %v186
  %v188 = vpop.f32.mrf.mxu0
  %189 = vmatprep.mubr.f32.mxu0 0.0
  %190 = vmatmul.mubr.f32.gmra.mxu0 %v81
  %v191 = vpop.f32.mrf.mxu0
  %v192 = vadd.f32 0.0, %v191
  %v193 = vpop.f32.mrf.mxu0
  %194 = vmatprep.mubr.f32.mxu0 0.0
  %195 = vmatmul.mubr.f32.gmra.mxu0 %v82
  %v196 = vpop.f32.mrf.mxu0
  %v197 = vadd.f32 0.0, %v196
  %v198 = vpop.f32.mrf.mxu0
  %199 = vmatprep.mubr.f32.mxu0 0.0
  %200 = vmatmul.mubr.f32.gmra.mxu0 %v83
  %v201 = vpop.f32.mrf.mxu0
  %v202 = vadd.f32 0.0, %v201
  %v203 = vpop.f32.mrf.mxu0
  %204 = vdwg.mxu0
  %205 = vst [vmem:[#allocation2] sm:$0xff] %v167
  %206 = vst [vmem:[#allocation2 + $0x8] sm:$0xff] %v172
  %207 = vst [vmem:[#allocation2 + $0x10] sm:$0xff] %v177
  %208 = vst [vmem:[#allocation2 + $0x18] sm:$0xff] %v182
  %209 = vst [vmem:[#allocation2 + $0x20] sm:$0xff] %v187
  %210 = vst [vmem:[#allocation2 + $0x28] sm:$0xff] %v192
  %211 = vst [vmem:[#allocation2 + $0x30] sm:$0xff] %v197
  %212 = vst [vmem:[#allocation2 + $0x38] sm:$0xff] %v202
  %v213 = vld [vmem:[#allocation2] sm:$0xff]
  %v214 = vld [vmem:[#allocation2 + $0x8] sm:$0xff]
  %v215 = vld [vmem:[#allocation2 + $0x10] sm:$0xff]
  %v216 = vld [vmem:[#allocation2 + $0x18] sm:$0xff]
  %v217 = vld [vmem:[#allocation2 + $0x20] sm:$0xff]
  %v218 = vld [vmem:[#allocation2 + $0x28] sm:$0xff]
  %v219 = vld [vmem:[#allocation2 + $0x30] sm:$0xff]
  %v220 = vld [vmem:[#allocation2 + $0x38] sm:$0xff]
  %v221 = vld [vmem:[%s2] sm:$0xff]
  %v222 = vld [vmem:[%s2 + $0x8] sm:$0xff]
  %v223 = vld [vmem:[%s2 + $0x10] sm:$0xff]
  %v224 = vld [vmem:[%s2 + $0x18] sm:$0xff]
  %v225 = vld [vmem:[%s2 + $0x20] sm:$0xff]
  %v226 = vld [vmem:[%s2 + $0x28] sm:$0xff]
  %v227 = vld [vmem:[%s2 + $0x30] sm:$0xff]
  %v228 = vld [vmem:[%s2 + $0x38] sm:$0xff]
  %v229 = vld [vmem:[%s2 + $0x40] sm:$0xff]
  %v230 = vld [vmem:[%s2 + $0x48] sm:$0xff]
  %v231 = vld [vmem:[%s2 + $0x50] sm:$0xff]
  %v232 = vld [vmem:[%s2 + $0x58] sm:$0xff]
  %v233 = vld [vmem:[%s2 + $0x60] sm:$0xff]
  %v234 = vld [vmem:[%s2 + $0x68] sm:$0xff]
  %v235 = vld [vmem:[%s2 + $0x70] sm:$0xff]
  %v236 = vld [vmem:[%s2 + $0x78] sm:$0xff]
  %v237 = vld [vmem:[%s4] sm:$0x1]
  %v239 = vlaneseq
  %v240 = vshrl.u32 %v239, 7
  %v241 = vsub.s32 0, %v240
  %v242 = vrot.slane %v237, %v241
  %244 = vmatprep.subr.mxu0 0.0
  %245 = vmatpush1.msra.mxu0 %v236
  %246 = vmatprep.subr.mxu0 0.0
  %247 = vmatpush1.msra.mxu0 %v235
  %248 = vmatprep.subr.mxu0 0.0
  %249 = vmatpush1.msra.mxu0 %v234
  %250 = vmatprep.subr.mxu0 0.0
  %251 = vmatpush1.msra.mxu0 %v233
  %252 = vmatprep.subr.mxu0 0.0
  %253 = vmatpush1.msra.mxu0 %v232
  %254 = vmatprep.subr.mxu0 0.0
  %255 = vmatpush1.msra.mxu0 %v231
  %256 = vmatprep.subr.mxu0 0.0
  %257 = vmatpush1.msra.mxu0 %v230
  %258 = vmatprep.subr.mxu0 0.0
  %259 = vmatpush1.msra.mxu0 %v229
  %260 = vmatprep.subr.mxu0 0.0
  %261 = vmatpush1.msra.mxu0 %v228
  %262 = vmatprep.subr.mxu0 0.0
  %263 = vmatpush1.msra.mxu0 %v227
  %264 = vmatprep.subr.mxu0 0.0
  %265 = vmatpush1.msra.mxu0 %v226
  %266 = vmatprep.subr.mxu0 0.0
  %267 = vmatpush1.msra.mxu0 %v225
  %268 = vmatprep.subr.mxu0 0.0
  %269 = vmatpush1.msra.mxu0 %v224
  %270 = vmatprep.subr.mxu0 0.0
  %271 = vmatpush1.msra.mxu0 %v223
  %272 = vmatprep.subr.mxu0 0.0
  %273 = vmatpush1.msra.mxu0 %v222
  %274 = vmatprep.subr.mxu0 0.0
  %275 = vmatpush1.msra.mxu0 %v221
  %276 = vmatprep.subr.mxu0 0.0
  %277 = vmatpush2.msra.mxu0 0.0
  %278 = vmatprep.subr.mxu0 0.0
  %279 = vmatpush2.msra.mxu0 0.0
  %280 = vmatprep.subr.mxu0 0.0
  %281 = vmatpush2.msra.mxu0 0.0
  %282 = vmatprep.subr.mxu0 0.0
  %283 = vmatpush2.msra.mxu0 0.0
  %284 = vmatprep.subr.mxu0 0.0
  %285 = vmatpush2.msra.mxu0 0.0
  %286 = vmatprep.subr.mxu0 0.0
  %287 = vmatpush2.msra.mxu0 0.0
  %288 = vmatprep.subr.mxu0 0.0
  %289 = vmatpush2.msra.mxu0 0.0
  %290 = vmatprep.subr.mxu0 0.0
  %291 = vmatpush2.msra.mxu0 0.0
  %292 = vmatprep.subr.mxu0 0.0
  %293 = vmatpush2.msra.mxu0 0.0
  %294 = vmatprep.subr.mxu0 0.0
  %295 = vmatpush2.msra.mxu0 0.0
  %296 = vmatprep.subr.mxu0 0.0
  %297 = vmatpush2.msra.mxu0 0.0
  %298 = vmatprep.subr.mxu0 0.0
  %299 = vmatpush2.msra.mxu0 0.0
  %300 = vmatprep.subr.mxu0 0.0
  %301 = vmatpush2.msra.mxu0 0.0
  %302 = vmatprep.subr.mxu0 0.0
  %303 = vmatpush2.msra.mxu0 0.0
  %304 = vmatprep.subr.mxu0 0.0
  %305 = vmatpush2.msra.mxu0 0.0
  %306 = vmatprep.subr.mxu0 0.0
  %307 = vmatpush2.msra.mxu0 0.0
  %308 = vmatprep.mubr.f32.mxu0 0.0
  %309 = vmatmul.mubr.f32.gmra.mxu0 %v213
  %v310 = vpop.f32.mrf.mxu0
  %v311 = vadd.f32 %v242, %v310
  %v312 = vpop.f32.mrf.mxu0
  %313 = vmatprep.mubr.f32.mxu0 0.0
  %314 = vmatmul.mubr.f32.gmra.mxu0 %v214
  %v315 = vpop.f32.mrf.mxu0
  %v316 = vadd.f32 %v242, %v315
  %v317 = vpop.f32.mrf.mxu0
  %318 = vmatprep.mubr.f32.mxu0 0.0
  %319 = vmatmul.mubr.f32.gmra.mxu0 %v215
  %v320 = vpop.f32.mrf.mxu0
  %v321 = vadd.f32 %v242, %v320
  %v322 = vpop.f32.mrf.mxu0
  %323 = vmatprep.mubr.f32.mxu0 0.0
  %324 = vmatmul.mubr.f32.gmra.mxu0 %v216
  %v325 = vpop.f32.mrf.mxu0
  %v326 = vadd.f32 %v242, %v325
  %v327 = vpop.f32.mrf.mxu0
  %328 = vmatprep.mubr.f32.mxu0 0.0
  %329 = vmatmul.mubr.f32.gmra.mxu0 %v217
  %v330 = vpop.f32.mrf.mxu0
  %v331 = vadd.f32 %v242, %v330
  %v332 = vpop.f32.mrf.mxu0
  %333 = vmatprep.mubr.f32.mxu0 0.0
  %334 = vmatmul.mubr.f32.gmra.mxu0 %v218
  %v335 = vpop.f32.mrf.mxu0
  %v336 = vadd.f32 %v242, %v335
  %v337 = vpop.f32.mrf.mxu0
  %338 = vmatprep.mubr.f32.mxu0 0.0
  %339 = vmatmul.mubr.f32.gmra.mxu0 %v219
  %v340 = vpop.f32.mrf.mxu0
  %v341 = vadd.f32 %v242, %v340
  %v342 = vpop.f32.mrf.mxu0
  %343 = vmatprep.mubr.f32.mxu0 0.0
  %344 = vmatmul.mubr.f32.gmra.mxu0 %v220
  %v345 = vpop.f32.mrf.mxu0
  %v346 = vadd.f32 %v242, %v345
  %v347 = vpop.f32.mrf.mxu0
  %348 = vdwg.mxu0
  %349 = vst [vmem:[#allocation3] sm:$0xff] %v311
  %350 = vst [vmem:[#allocation3 + $0x8] sm:$0xff] %v316
  %351 = vst [vmem:[#allocation3 + $0x10] sm:$0xff] %v321
  %352 = vst [vmem:[#allocation3 + $0x18] sm:$0xff] %v326
  %353 = vst [vmem:[#allocation3 + $0x20] sm:$0xff] %v331
  %354 = vst [vmem:[#allocation3 + $0x28] sm:$0xff] %v336
  %355 = vst [vmem:[#allocation3 + $0x30] sm:$0xff] %v341
  %356 = vst [vmem:[#allocation3 + $0x38] sm:$0xff] %v346
  %v357 = vld [vmem:[%s3] sm:$0xff]
  %v358 = vld [vmem:[%s3 + $0x8] sm:$0xff]
  %v359 = vld [vmem:[%s3 + $0x10] sm:$0xff]
  %v360 = vld [vmem:[%s3 + $0x18] sm:$0xff]
  %v361 = vld [vmem:[%s3 + $0x20] sm:$0xff]
  %v362 = vld [vmem:[%s3 + $0x28] sm:$0xff]
  %v363 = vld [vmem:[%s3 + $0x30] sm:$0xff]
  %v364 = vld [vmem:[%s3 + $0x38] sm:$0xff]
  %v365 = vld [vmem:[%s3 + $0x40] sm:$0xff]
  %v366 = vld [vmem:[%s3 + $0x48] sm:$0xff]
  %v367 = vld [vmem:[%s3 + $0x50] sm:$0xff]
  %v368 = vld [vmem:[%s3 + $0x58] sm:$0xff]
  %v369 = vld [vmem:[%s3 + $0x60] sm:$0xff]
  %v370 = vld [vmem:[%s3 + $0x68] sm:$0xff]
  %v371 = vld [vmem:[%s3 + $0x70] sm:$0xff]
  %v372 = vld [vmem:[%s3 + $0x78] sm:$0xff]
  %v373 = vld [vmem:[#allocation3] sm:$0xff]
  %374 = vmatprep.subr.mxu0 0.0
  %375 = vmatpush1.msra.mxu0 %v372
  %376 = vmatprep.subr.mxu0 0.0
  %377 = vmatpush1.msra.mxu0 %v371
  %378 = vmatprep.subr.mxu0 0.0
  %379 = vmatpush1.msra.mxu0 %v370
  %380 = vmatprep.subr.mxu0 0.0
  %381 = vmatpush1.msra.mxu0 %v369
  %382 = vmatprep.subr.mxu0 0.0
  %383 = vmatpush1.msra.mxu0 %v368
  %384 = vmatprep.subr.mxu0 0.0
  %385 = vmatpush1.msra.mxu0 %v367
  %386 = vmatprep.subr.mxu0 0.0
  %387 = vmatpush1.msra.mxu0 %v366
  %388 = vmatprep.subr.mxu0 0.0
  %389 = vmatpush1.msra.mxu0 %v365
  %390 = vmatprep.subr.mxu0 0.0
  %391 = vmatpush1.msra.mxu0 %v364
  %392 = vmatprep.subr.mxu0 0.0
  %393 = vmatpush1.msra.mxu0 %v363
  %394 = vmatprep.subr.mxu0 0.0
  %395 = vmatpush1.msra.mxu0 %v362
  %396 = vmatprep.subr.mxu0 0.0
  %397 = vmatpush1.msra.mxu0 %v361
  %398 = vmatprep.subr.mxu0 0.0
  %399 = vmatpush1.msra.mxu0 %v360
  %400 = vmatprep.subr.mxu0 0.0
  %401 = vmatpush1.msra.mxu0 %v359
  %402 = vmatprep.subr.mxu0 0.0
  %403 = vmatpush1.msra.mxu0 %v358
  %404 = vmatprep.subr.mxu0 0.0
  %405 = vmatpush1.msra.mxu0 %v357
  %406 = vmatprep.subr.mxu0 0.0
  %407 = vmatpush2.msra.mxu0 0.0
  %408 = vmatprep.subr.mxu0 0.0
  %409 = vmatpush2.msra.mxu0 0.0
  %410 = vmatprep.subr.mxu0 0.0
  %411 = vmatpush2.msra.mxu0 0.0
  %412 = vmatprep.subr.mxu0 0.0
  %413 = vmatpush2.msra.mxu0 0.0
  %414 = vmatprep.subr.mxu0 0.0
  %415 = vmatpush2.msra.mxu0 0.0
  %416 = vmatprep.subr.mxu0 0.0
  %417 = vmatpush2.msra.mxu0 0.0
  %418 = vmatprep.subr.mxu0 0.0
  %419 = vmatpush2.msra.mxu0 0.0
  %420 = vmatprep.subr.mxu0 0.0
  %421 = vmatpush2.msra.mxu0 0.0
  %422 = vmatprep.subr.mxu0 0.0
  %423 = vmatpush2.msra.mxu0 0.0
  %424 = vmatprep.subr.mxu0 0.0
  %425 = vmatpush2.msra.mxu0 0.0
  %426 = vmatprep.subr.mxu0 0.0
  %427 = vmatpush2.msra.mxu0 0.0
  %428 = vmatprep.subr.mxu0 0.0
  %429 = vmatpush2.msra.mxu0 0.0
  %430 = vmatprep.subr.mxu0 0.0
  %431 = vmatpush2.msra.mxu0 0.0
  %432 = vmatprep.subr.mxu0 0.0
  %433 = vmatpush2.msra.mxu0 0.0
  %434 = vmatprep.subr.mxu0 0.0
  %435 = vmatpush2.msra.mxu0 0.0
  %436 = vmatprep.subr.mxu0 0.0
  %437 = vmatpush2.msra.mxu0 0.0
  %438 = vmatprep.mubr.f32.mxu0 0.0
  %439 = vmatmul.mubr.f32.gmra.mxu0 0.0
  %v440 = vpop.f32.mrf.mxu0
  %v441 = vadd.f32 0.0, %v440
  %v442 = vpop.f32.mrf.mxu0
  %443 = vdwg.mxu0
  %v444 = vadd.f32 %v373, %v441
  %v445 = vtanh.pop %v444
  %446 = vst [vmem:[#allocation2] sm:$0xff] %v445
  %v447 = vld [vmem:[#allocation3 + $0x8] sm:$0xff]
  %448 = vmatprep.subr.mxu0 0.0
  %449 = vmatpush1.msra.mxu0 %v372
  %450 = vmatprep.subr.mxu0 0.0
  %451 = vmatpush1.msra.mxu0 %v371
  %452 = vmatprep.subr.mxu0 0.0
  %453 = vmatpush1.msra.mxu0 %v370
  %454 = vmatprep.subr.mxu0 0.0
  %455 = vmatpush1.msra.mxu0 %v369
  %456 = vmatprep.subr.mxu0 0.0
  %457 = vmatpush1.msra.mxu0 %v368
  %458 = vmatprep.subr.mxu0 0.0
  %459 = vmatpush1.msra.mxu0 %v367
  %460 = vmatprep.subr.mxu0 0.0
  %461 = vmatpush1.msra.mxu0 %v366
  %462 = vmatprep.subr.mxu0 0.0
  %463 = vmatpush1.msra.mxu0 %v365
  %464 = vmatprep.subr.mxu0 0.0
  %465 = vmatpush1.msra.mxu0 %v364
  %466 = vmatprep.subr.mxu0 0.0
  %467 = vmatpush1.msra.mxu0 %v363
  %468 = vmatprep.subr.mxu0 0.0
  %469 = vmatpush1.msra.mxu0 %v362
  %470 = vmatprep.subr.mxu0 0.0
  %471 = vmatpush1.msra.mxu0 %v361
  %472 = vmatprep.subr.mxu0 0.0
  %473 = vmatpush1.msra.mxu0 %v360
  %474 = vmatprep.subr.mxu0 0.0
  %475 = vmatpush1.msra.mxu0 %v359
  %476 = vmatprep.subr.mxu0 0.0
  %477 = vmatpush1.msra.mxu0 %v358
  %478 = vmatprep.subr.mxu0 0.0
  %479 = vmatpush1.msra.mxu0 %v357
  %480 = vmatprep.subr.mxu0 0.0
  %481 = vmatpush2.msra.mxu0 0.0
  %482 = vmatprep.subr.mxu0 0.0
  %483 = vmatpush2.msra.mxu0 0.0
  %484 = vmatprep.subr.mxu0 0.0
  %485 = vmatpush2.msra.mxu0 0.0
  %486 = vmatprep.subr.mxu0 0.0
  %487 = vmatpush2.msra.mxu0 0.0
  %488 = vmatprep.subr.mxu0 0.0
  %489 = vmatpush2.msra.mxu0 0.0
  %490 = vmatprep.subr.mxu0 0.0
  %491 = vmatpush2.msra.mxu0 0.0
  %492 = vmatprep.subr.mxu0 0.0
  %493 = vmatpush2.msra.mxu0 0.0
  %494 = vmatprep.subr.mxu0 0.0
  %495 = vmatpush2.msra.mxu0 0.0
  %496 = vmatprep.subr.mxu0 0.0
  %497 = vmatpush2.msra.mxu0 0.0
  %498 = vmatprep.subr.mxu0 0.0
  %499 = vmatpush2.msra.mxu0 0.0
  %500 = vmatprep.subr.mxu0 0.0
  %501 = vmatpush2.msra.mxu0 0.0
  %502 = vmatprep.subr.mxu0 0.0
  %503 = vmatpush2.msra.mxu0 0.0
  %504 = vmatprep.subr.mxu0 0.0
  %505 = vmatpush2.msra.mxu0 0.0
  %506 = vmatprep.subr.mxu0 0.0
  %507 = vmatpush2.msra.mxu0 0.0
  %508 = vmatprep.subr.mxu0 0.0
  %509 = vmatpush2.msra.mxu0 0.0
  %510 = vmatprep.subr.mxu0 0.0
  %511 = vmatpush2.msra.mxu0 0.0
  %512 = vmatprep.mubr.f32.mxu0 0.0
  %513 = vmatmul.mubr.f32.gmra.mxu0 %v445
  %v514 = vpop.f32.mrf.mxu0
  %v515 = vadd.f32 0.0, %v514
  %v516 = vpop.f32.mrf.mxu0
  %517 = vdwg.mxu0
  %v518 = vadd.f32 %v447, %v515
  %v519 = vtanh.pop %v518
  %520 = vst [vmem:[#allocation2 + $0x8] sm:$0xff] %v519
  %v521 = vld [vmem:[#allocation3 + $0x10] sm:$0xff]
  %522 = vmatprep.subr.mxu0 0.0
  %523 = vmatpush1.msra.mxu0 %v372
  %524 = vmatprep.subr.mxu0 0.0
  %525 = vmatpush1.msra.mxu0 %v371
  %526 = vmatprep.subr.mxu0 0.0
  %527 = vmatpush1.msra.mxu0 %v370
  %528 = vmatprep.subr.mxu0 0.0
  %529 = vmatpush1.msra.mxu0 %v369
  %530 = vmatprep.subr.mxu0 0.0
  %531 = vmatpush1.msra.mxu0 %v368
  %532 = vmatprep.subr.mxu0 0.0
  %533 = vmatpush1.msra.mxu0 %v367
  %534 = vmatprep.subr.mxu0 0.0
  %535 = vmatpush1.msra.mxu0 %v366
  %536 = vmatprep.subr.mxu0 0.0
  %537 = vmatpush1.msra.mxu0 %v365
  %538 = vmatprep.subr.mxu0 0.0
  %539 = vmatpush1.msra.mxu0 %v364
  %540 = vmatprep.subr.mxu0 0.0
  %541 = vmatpush1.msra.mxu0 %v363
  %542 = vmatprep.subr.mxu0 0.0
  %543 = vmatpush1.msra.mxu0 %v362
  %544 = vmatprep.subr.mxu0 0.0
  %545 = vmatpush1.msra.mxu0 %v361
  %546 = vmatprep.subr.mxu0 0.0
  %547 = vmatpush1.msra.mxu0 %v360
  %548 = vmatprep.subr.mxu0 0.0
  %549 = vmatpush1.msra.mxu0 %v359
  %550 = vmatprep.subr.mxu0 0.0
  %551 = vmatpush1.msra.mxu0 %v358
  %552 = vmatprep.subr.mxu0 0.0
  %553 = vmatpush1.msra.mxu0 %v357
  %554 = vmatprep.subr.mxu0 0.0
  %555 = vmatpush2.msra.mxu0 0.0
  %556 = vmatprep.subr.mxu0 0.0
  %557 = vmatpush2.msra.mxu0 0.0
  %558 = vmatprep.subr.mxu0 0.0
  %559 = vmatpush2.msra.mxu0 0.0
  %560 = vmatprep.subr.mxu0 0.0
  %561 = vmatpush2.msra.mxu0 0.0
  %562 = vmatprep.subr.mxu0 0.0
  %563 = vmatpush2.msra.mxu0 0.0
  %564 = vmatprep.subr.mxu0 0.0
  %565 = vmatpush2.msra.mxu0 0.0
  %566 = vmatprep.subr.mxu0 0.0
  %567 = vmatpush2.msra.mxu0 0.0
  %568 = vmatprep.subr.mxu0 0.0
  %569 = vmatpush2.msra.mxu0 0.0
  %570 = vmatprep.subr.mxu0 0.0
  %571 = vmatpush2.msra.mxu0 0.0
  %572 = vmatprep.subr.mxu0 0.0
  %573 = vmatpush2.msra.mxu0 0.0
  %574 = vmatprep.subr.mxu0 0.0
  %575 = vmatpush2.msra.mxu0 0.0
  %576 = vmatprep.subr.mxu0 0.0
  %577 = vmatpush2.msra.mxu0 0.0
  %578 = vmatprep.subr.mxu0 0.0
  %579 = vmatpush2.msra.mxu0 0.0
  %580 = vmatprep.subr.mxu0 0.0
  %581 = vmatpush2.msra.mxu0 0.0
  %582 = vmatprep.subr.mxu0 0.0
  %583 = vmatpush2.msra.mxu0 0.0
  %584 = vmatprep.subr.mxu0 0.0
  %585 = vmatpush2.msra.mxu0 0.0
  %586 = vmatprep.mubr.f32.mxu0 0.0
  %587 = vmatmul.mubr.f32.gmra.mxu0 %v519
  %v588 = vpop.f32.mrf.mxu0
  %v589 = vadd.f32 0.0, %v588
  %v590 = vpop.f32.mrf.mxu0
  %591 = vdwg.mxu0
  %v592 = vadd.f32 %v521, %v589
  %v593 = vtanh.pop %v592
  %594 = vst [vmem:[#allocation2 + $0x10] sm:$0xff] %v593
  %v595 = vld [vmem:[#allocation3 + $0x18] sm:$0xff]
  %596 = vmatprep.subr.mxu0 0.0
  %597 = vmatpush1.msra.mxu0 %v372
  %598 = vmatprep.subr.mxu0 0.0
  %599 = vmatpush1.msra.mxu0 %v371
  %600 = vmatprep.subr.mxu0 0.0
  %601 = vmatpush1.msra.mxu0 %v370
  %602 = vmatprep.subr.mxu0 0.0
  %603 = vmatpush1.msra.mxu0 %v369
  %604 = vmatprep.subr.mxu0 0.0
  %605 = vmatpush1.msra.mxu0 %v368
  %606 = vmatprep.subr.mxu0 0.0
  %607 = vmatpush1.msra.mxu0 %v367
  %608 = vmatprep.subr.mxu0 0.0
  %609 = vmatpush1.msra.mxu0 %v366
  %610 = vmatprep.subr.mxu0 0.0
  %611 = vmatpush1.msra.mxu0 %v365
  %612 = vmatprep.subr.mxu0 0.0
  %613 = vmatpush1.msra.mxu0 %v364
  %614 = vmatprep.subr.mxu0 0.0
  %615 = vmatpush1.msra.mxu0 %v363
  %616 = vmatprep.subr.mxu0 0.0
  %617 = vmatpush1.msra.mxu0 %v362
  %618 = vmatprep.subr.mxu0 0.0
  %619 = vmatpush1.msra.mxu0 %v361
  %620 = vmatprep.subr.mxu0 0.0
  %621 = vmatpush1.msra.mxu0 %v360
  %622 = vmatprep.subr.mxu0 0.0
  %623 = vmatpush1.msra.mxu0 %v359
  %624 = vmatprep.subr.mxu0 0.0
  %625 = vmatpush1.msra.mxu0 %v358
  %626 = vmatprep.subr.mxu0 0.0
  %627 = vmatpush1.msra.mxu0 %v357
  %628 = vmatprep.subr.mxu0 0.0
  %629 = vmatpush2.msra.mxu0 0.0
  %630 = vmatprep.subr.mxu0 0.0
  %631 = vmatpush2.msra.mxu0 0.0
  %632 = vmatprep.subr.mxu0 0.0
  %633 = vmatpush2.msra.mxu0 0.0
  %634 = vmatprep.subr.mxu0 0.0
  %635 = vmatpush2.msra.mxu0 0.0
  %636 = vmatprep.subr.mxu0 0.0
  %637 = vmatpush2.msra.mxu0 0.0
  %638 = vmatprep.subr.mxu0 0.0
  %639 = vmatpush2.msra.mxu0 0.0
  %640 = vmatprep.subr.mxu0 0.0
  %641 = vmatpush2.msra.mxu0 0.0
  %642 = vmatprep.subr.mxu0 0.0
  %643 = vmatpush2.msra.mxu0 0.0
  %644 = vmatprep.subr.mxu0 0.0
  %645 = vmatpush2.msra.mxu0 0.0
  %646 = vmatprep.subr.mxu0 0.0
  %647 = vmatpush2.msra.mxu0 0.0
  %648 = vmatprep.subr.mxu0 0.0
  %649 = vmatpush2.msra.mxu0 0.0
  %650 = vmatprep.subr.mxu0 0.0
  %651 = vmatpush2.msra.mxu0 0.0
  %652 = vmatprep.subr.mxu0 0.0
  %653 = vmatpush2.msra.mxu0 0.0
  %654 = vmatprep.subr.mxu0 0.0
  %655 = vmatpush2.msra.mxu0 0.0
  %656 = vmatprep.subr.mxu0 0.0
  %657 = vmatpush2.msra.mxu0 0.0
  %658 = vmatprep.subr.mxu0 0.0
  %659 = vmatpush2.msra.mxu0 0.0
  %660 = vmatprep.mubr.f32.mxu0 0.0
  %661 = vmatmul.mubr.f32.gmra.mxu0 %v593
  %v662 = vpop.f32.mrf.mxu0
  %v663 = vadd.f32 0.0, %v662
  %v664 = vpop.f32.mrf.mxu0
  %665 = vdwg.mxu0
  %v666 = vadd.f32 %v595, %v663
  %v667 = vtanh.pop %v666
  %668 = vst [vmem:[#allocation2 + $0x18] sm:$0xff] %v667
  %v669 = vld [vmem:[#allocation3 + $0x20] sm:$0xff]
  %670 = vmatprep.subr.mxu0 0.0
  %671 = vmatpush1.msra.mxu0 %v372
  %672 = vmatprep.subr.mxu0 0.0
  %673 = vmatpush1.msra.mxu0 %v371
  %674 = vmatprep.subr.mxu0 0.0
  %675 = vmatpush1.msra.mxu0 %v370
  %676 = vmatprep.subr.mxu0 0.0
  %677 = vmatpush1.msra.mxu0 %v369
  %678 = vmatprep.subr.mxu0 0.0
  %679 = vmatpush1.msra.mxu0 %v368
  %680 = vmatprep.subr.mxu0 0.0
  %681 = vmatpush1.msra.mxu0 %v367
  %682 = vmatprep.subr.mxu0 0.0
  %683 = vmatpush1.msra.mxu0 %v366
  %684 = vmatprep.subr.mxu0 0.0
  %685 = vmatpush1.msra.mxu0 %v365
  %686 = vmatprep.subr.mxu0 0.0
  %687 = vmatpush1.msra.mxu0 %v364
  %688 = vmatprep.subr.mxu0 0.0
  %689 = vmatpush1.msra.mxu0 %v363
  %690 = vmatprep.subr.mxu0 0.0
  %691 = vmatpush1.msra.mxu0 %v362
  %692 = vmatprep.subr.mxu0 0.0
  %693 = vmatpush1.msra.mxu0 %v361
  %694 = vmatprep.subr.mxu0 0.0
  %695 = vmatpush1.msra.mxu0 %v360
  %696 = vmatprep.subr.mxu0 0.0
  %697 = vmatpush1.msra.mxu0 %v359
  %698 = vmatprep.subr.mxu0 0.0
  %699 = vmatpush1.msra.mxu0 %v358
  %700 = vmatprep.subr.mxu0 0.0
  %701 = vmatpush1.msra.mxu0 %v357
  %702 = vmatprep.subr.mxu0 0.0
  %703 = vmatpush2.msra.mxu0 0.0
  %704 = vmatprep.subr.mxu0 0.0
  %705 = vmatpush2.msra.mxu0 0.0
  %706 = vmatprep.subr.mxu0 0.0
  %707 = vmatpush2.msra.mxu0 0.0
  %708 = vmatprep.subr.mxu0 0.0
  %709 = vmatpush2.msra.mxu0 0.0
  %710 = vmatprep.subr.mxu0 0.0
  %711 = vmatpush2.msra.mxu0 0.0
  %712 = vmatprep.subr.mxu0 0.0
  %713 = vmatpush2.msra.mxu0 0.0
  %714 = vmatprep.subr.mxu0 0.0
  %715 = vmatpush2.msra.mxu0 0.0
  %716 = vmatprep.subr.mxu0 0.0
  %717 = vmatpush2.msra.mxu0 0.0
  %718 = vmatprep.subr.mxu0 0.0
  %719 = vmatpush2.msra.mxu0 0.0
  %720 = vmatprep.subr.mxu0 0.0
  %721 = vmatpush2.msra.mxu0 0.0
  %722 = vmatprep.subr.mxu0 0.0
  %723 = vmatpush2.msra.mxu0 0.0
  %724 = vmatprep.subr.mxu0 0.0
  %725 = vmatpush2.msra.mxu0 0.0
  %726 = vmatprep.subr.mxu0 0.0
  %727 = vmatpush2.msra.mxu0 0.0
  %728 = vmatprep.subr.mxu0 0.0
  %729 = vmatpush2.msra.mxu0 0.0
  %730 = vmatprep.subr.mxu0 0.0
  %731 = vmatpush2.msra.mxu0 0.0
  %732 = vmatprep.subr.mxu0 0.0
  %733 = vmatpush2.msra.mxu0 0.0
  %734 = vmatprep.mubr.f32.mxu0 0.0
  %735 = vmatmul.mubr.f32.gmra.mxu0 %v667
  %v736 = vpop.f32.mrf.mxu0
  %v737 = vadd.f32 0.0, %v736
  %v738 = vpop.f32.mrf.mxu0
  %739 = vdwg.mxu0
  %v740 = vadd.f32 %v669, %v737
  %v741 = vtanh.pop %v740
  %742 = vst [vmem:[#allocation2 + $0x20] sm:$0xff] %v741
  %v743 = vld [vmem:[#allocation3 + $0x28] sm:$0xff]
  %744 = vmatprep.subr.mxu0 0.0
  %745 = vmatpush1.msra.mxu0 %v372
  %746 = vmatprep.subr.mxu0 0.0
  %747 = vmatpush1.msra.mxu0 %v371
  %748 = vmatprep.subr.mxu0 0.0
  %749 = vmatpush1.msra.mxu0 %v370
  %750 = vmatprep.subr.mxu0 0.0
  %751 = vmatpush1.msra.mxu0 %v369
  %752 = vmatprep.subr.mxu0 0.0
  %753 = vmatpush1.msra.mxu0 %v368
  %754 = vmatprep.subr.mxu0 0.0
  %755 = vmatpush1.msra.mxu0 %v367
  %756 = vmatprep.subr.mxu0 0.0
  %757 = vmatpush1.msra.mxu0 %v366
  %758 = vmatprep.subr.mxu0 0.0
  %759 = vmatpush1.msra.mxu0 %v365
  %760 = vmatprep.subr.mxu0 0.0
  %761 = vmatpush1.msra.mxu0 %v364
  %762 = vmatprep.subr.mxu0 0.0
  %763 = vmatpush1.msra.mxu0 %v363
  %764 = vmatprep.subr.mxu0 0.0
  %765 = vmatpush1.msra.mxu0 %v362
  %766 = vmatprep.subr.mxu0 0.0
  %767 = vmatpush1.msra.mxu0 %v361
  %768 = vmatprep.subr.mxu0 0.0
  %769 = vmatpush1.msra.mxu0 %v360
  %770 = vmatprep.subr.mxu0 0.0
  %771 = vmatpush1.msra.mxu0 %v359
  %772 = vmatprep.subr.mxu0 0.0
  %773 = vmatpush1.msra.mxu0 %v358
  %774 = vmatprep.subr.mxu0 0.0
  %775 = vmatpush1.msra.mxu0 %v357
  %776 = vmatprep.subr.mxu0 0.0
  %777 = vmatpush2.msra.mxu0 0.0
  %778 = vmatprep.subr.mxu0 0.0
  %779 = vmatpush2.msra.mxu0 0.0
  %780 = vmatprep.subr.mxu0 0.0
  %781 = vmatpush2.msra.mxu0 0.0
  %782 = vmatprep.subr.mxu0 0.0
  %783 = vmatpush2.msra.mxu0 0.0
  %784 = vmatprep.subr.mxu0 0.0
  %785 = vmatpush2.msra.mxu0 0.0
  %786 = vmatprep.subr.mxu0 0.0
  %787 = vmatpush2.msra.mxu0 0.0
  %788 = vmatprep.subr.mxu0 0.0
  %789 = vmatpush2.msra.mxu0 0.0
  %790 = vmatprep.subr.mxu0 0.0
  %791 = vmatpush2.msra.mxu0 0.0
  %792 = vmatprep.subr.mxu0 0.0
  %793 = vmatpush2.msra.mxu0 0.0
  %794 = vmatprep.subr.mxu0 0.0
  %795 = vmatpush2.msra.mxu0 0.0
  %796 = vmatprep.subr.mxu0 0.0
  %797 = vmatpush2.msra.mxu0 0.0
  %798 = vmatprep.subr.mxu0 0.0
  %799 = vmatpush2.msra.mxu0 0.0
  %800 = vmatprep.subr.mxu0 0.0
  %801 = vmatpush2.msra.mxu0 0.0
  %802 = vmatprep.subr.mxu0 0.0
  %803 = vmatpush2.msra.mxu0 0.0
  %804 = vmatprep.subr.mxu0 0.0
  %805 = vmatpush2.msra.mxu0 0.0
  %806 = vmatprep.subr.mxu0 0.0
  %807 = vmatpush2.msra.mxu0 0.0
  %808 = vmatprep.mubr.f32.mxu0 0.0
  %809 = vmatmul.mubr.f32.gmra.mxu0 %v741
  %v810 = vpop.f32.mrf.mxu0
  %v811 = vadd.f32 0.0, %v810
  %v812 = vpop.f32.mrf.mxu0
  %813 = vdwg.mxu0
  %v814 = vadd.f32 %v743, %v811
  %v815 = vtanh.pop %v814
  %816 = vst [vmem:[#allocation2 + $0x28] sm:$0xff] %v815
  %v817 = vld [vmem:[#allocation3 + $0x30] sm:$0xff]
  %818 = vmatprep.subr.mxu0 0.0
  %819 = vmatpush1.msra.mxu0 %v372
  %820 = vmatprep.subr.mxu0 0.0
  %821 = vmatpush1.msra.mxu0 %v371
  %822 = vmatprep.subr.mxu0 0.0
  %823 = vmatpush1.msra.mxu0 %v370
  %824 = vmatprep.subr.mxu0 0.0
  %825 = vmatpush1.msra.mxu0 %v369
  %826 = vmatprep.subr.mxu0 0.0
  %827 = vmatpush1.msra.mxu0 %v368
  %828 = vmatprep.subr.mxu0 0.0
  %829 = vmatpush1.msra.mxu0 %v367
  %830 = vmatprep.subr.mxu0 0.0
  %831 = vmatpush1.msra.mxu0 %v366
  %832 = vmatprep.subr.mxu0 0.0
  %833 = vmatpush1.msra.mxu0 %v365
  %834 = vmatprep.subr.mxu0 0.0
  %835 = vmatpush1.msra.mxu0 %v364
  %836 = vmatprep.subr.mxu0 0.0
  %837 = vmatpush1.msra.mxu0 %v363
  %838 = vmatprep.subr.mxu0 0.0
  %839 = vmatpush1.msra.mxu0 %v362
  %840 = vmatprep.subr.mxu0 0.0
  %841 = vmatpush1.msra.mxu0 %v361
  %842 = vmatprep.subr.mxu0 0.0
  %843 = vmatpush1.msra.mxu0 %v360
  %844 = vmatprep.subr.mxu0 0.0
  %845 = vmatpush1.msra.mxu0 %v359
  %846 = vmatprep.subr.mxu0 0.0
  %847 = vmatpush1.msra.mxu0 %v358
  %848 = vmatprep.subr.mxu0 0.0
  %849 = vmatpush1.msra.mxu0 %v357
  %850 = vmatprep.subr.mxu0 0.0
  %851 = vmatpush2.msra.mxu0 0.0
  %852 = vmatprep.subr.mxu0 0.0
  %853 = vmatpush2.msra.mxu0 0.0
  %854 = vmatprep.subr.mxu0 0.0
  %855 = vmatpush2.msra.mxu0 0.0
  %856 = vmatprep.subr.mxu0 0.0
  %857 = vmatpush2.msra.mxu0 0.0
  %858 = vmatprep.subr.mxu0 0.0
  %859 = vmatpush2.msra.mxu0 0.0
  %860 = vmatprep.subr.mxu0 0.0
  %861 = vmatpush2.msra.mxu0 0.0
  %862 = vmatprep.subr.mxu0 0.0
  %863 = vmatpush2.msra.mxu0 0.0
  %864 = vmatprep.subr.mxu0 0.0
  %865 = vmatpush2.msra.mxu0 0.0
  %866 = vmatprep.subr.mxu0 0.0
  %867 = vmatpush2.msra.mxu0 0.0
  %868 = vmatprep.subr.mxu0 0.0
  %869 = vmatpush2.msra.mxu0 0.0
  %870 = vmatprep.subr.mxu0 0.0
  %871 = vmatpush2.msra.mxu0 0.0
  %872 = vmatprep.subr.mxu0 0.0
  %873 = vmatpush2.msra.mxu0 0.0
  %874 = vmatprep.subr.mxu0 0.0
  %875 = vmatpush2.msra.mxu0 0.0
  %876 = vmatprep.subr.mxu0 0.0
  %877 = vmatpush2.msra.mxu0 0.0
  %878 = vmatprep.subr.mxu0 0.0
  %879 = vmatpush2.msra.mxu0 0.0
  %880 = vmatprep.subr.mxu0 0.0
  %881 = vmatpush2.msra.mxu0 0.0
  %882 = vmatprep.mubr.f32.mxu0 0.0
  %883 = vmatmul.mubr.f32.gmra.mxu0 %v815
  %v884 = vpop.f32.mrf.mxu0
  %v885 = vadd.f32 0.0, %v884
  %v886 = vpop.f32.mrf.mxu0
  %887 = vdwg.mxu0
  %v888 = vadd.f32 %v817, %v885
  %v889 = vtanh.pop %v888
  %890 = vst [vmem:[#allocation2 + $0x30] sm:$0xff] %v889
  %v891 = vld [vmem:[#allocation3 + $0x38] sm:$0xff]
  %892 = vmatprep.subr.mxu0 0.0
  %893 = vmatpush1.msra.mxu0 %v372
  %894 = vmatprep.subr.mxu0 0.0
  %895 = vmatpush1.msra.mxu0 %v371
  %896 = vmatprep.subr.mxu0 0.0
  %897 = vmatpush1.msra.mxu0 %v370
  %898 = vmatprep.subr.mxu0 0.0
  %899 = vmatpush1.msra.mxu0 %v369
  %900 = vmatprep.subr.mxu0 0.0
  %901 = vmatpush1.msra.mxu0 %v368
  %902 = vmatprep.subr.mxu0 0.0
  %903 = vmatpush1.msra.mxu0 %v367
  %904 = vmatprep.subr.mxu0 0.0
  %905 = vmatpush1.msra.mxu0 %v366
  %906 = vmatprep.subr.mxu0 0.0
  %907 = vmatpush1.msra.mxu0 %v365
  %908 = vmatprep.subr.mxu0 0.0
  %909 = vmatpush1.msra.mxu0 %v364
  %910 = vmatprep.subr.mxu0 0.0
  %911 = vmatpush1.msra.mxu0 %v363
  %912 = vmatprep.subr.mxu0 0.0
  %913 = vmatpush1.msra.mxu0 %v362
  %914 = vmatprep.subr.mxu0 0.0
  %915 = vmatpush1.msra.mxu0 %v361
  %916 = vmatprep.subr.mxu0 0.0
  %917 = vmatpush1.msra.mxu0 %v360
  %918 = vmatprep.subr.mxu0 0.0
  %919 = vmatpush1.msra.mxu0 %v359
  %920 = vmatprep.subr.mxu0 0.0
  %921 = vmatpush1.msra.mxu0 %v358
  %922 = vmatprep.subr.mxu0 0.0
  %923 = vmatpush1.msra.mxu0 %v357
  %924 = vmatprep.subr.mxu0 0.0
  %925 = vmatpush2.msra.mxu0 0.0
  %926 = vmatprep.subr.mxu0 0.0
  %927 = vmatpush2.msra.mxu0 0.0
  %928 = vmatprep.subr.mxu0 0.0
  %929 = vmatpush2.msra.mxu0 0.0
  %930 = vmatprep.subr.mxu0 0.0
  %931 = vmatpush2.msra.mxu0 0.0
  %932 = vmatprep.subr.mxu0 0.0
  %933 = vmatpush2.msra.mxu0 0.0
  %934 = vmatprep.subr.mxu0 0.0
  %935 = vmatpush2.msra.mxu0 0.0
  %936 = vmatprep.subr.mxu0 0.0
  %937 = vmatpush2.msra.mxu0 0.0
  %938 = vmatprep.subr.mxu0 0.0
  %939 = vmatpush2.msra.mxu0 0.0
  %940 = vmatprep.subr.mxu0 0.0
  %941 = vmatpush2.msra.mxu0 0.0
  %942 = vmatprep.subr.mxu0 0.0
  %943 = vmatpush2.msra.mxu0 0.0
  %944 = vmatprep.subr.mxu0 0.0
  %945 = vmatpush2.msra.mxu0 0.0
  %946 = vmatprep.subr.mxu0 0.0
  %947 = vmatpush2.msra.mxu0 0.0
  %948 = vmatprep.subr.mxu0 0.0
  %949 = vmatpush2.msra.mxu0 0.0
  %950 = vmatprep.subr.mxu0 0.0
  %951 = vmatpush2.msra.mxu0 0.0
  %952 = vmatprep.subr.mxu0 0.0
  %953 = vmatpush2.msra.mxu0 0.0
  %954 = vmatprep.subr.mxu0 0.0
  %955 = vmatpush2.msra.mxu0 0.0
  %956 = vmatprep.mubr.f32.mxu0 0.0
  %957 = vmatmul.mubr.f32.gmra.mxu0 %v889
  %v958 = vpop.f32.mrf.mxu0
  %v959 = vadd.f32 0.0, %v958
  %v960 = vpop.f32.mrf.mxu0
  %961 = vdwg.mxu0
  %v962 = vadd.f32 %v891, %v959
  %v963 = vtanh.pop %v962
  %964 = vst [vmem:[#allocation2 + $0x38] sm:$0xff] %v963
  %v965 = vld [vmem:[#allocation2] sm:$0xff]
  %v966 = vld [vmem:[#allocation2 + $0x8] sm:$0xff]
  %v967 = vld [vmem:[#allocation2 + $0x10] sm:$0xff]
  %v968 = vld [vmem:[#allocation2 + $0x18] sm:$0xff]
  %v969 = vld [vmem:[#allocation2 + $0x20] sm:$0xff]
  %v970 = vld [vmem:[#allocation2 + $0x28] sm:$0xff]
  %v971 = vld [vmem:[#allocation2 + $0x30] sm:$0xff]
  %v972 = vld [vmem:[#allocation2 + $0x38] sm:$0xff]
  %s973 = scalar_lea.vmem %s2, 128
  %v974 = vld [vmem:[%s973] sm:$0xff]
  %v975 = vld [vmem:[%s973 + $0x8] sm:$0xff]
  %v976 = vld [vmem:[%s973 + $0x10] sm:$0xff]
  %v977 = vld [vmem:[%s973 + $0x18] sm:$0xff]
  %v978 = vld [vmem:[%s973 + $0x20] sm:$0xff]
  %v979 = vld [vmem:[%s973 + $0x28] sm:$0xff]
  %v980 = vld [vmem:[%s973 + $0x30] sm:$0xff]
  %v981 = vld [vmem:[%s973 + $0x38] sm:$0xff]
  %v982 = vld [vmem:[%s973 + $0x40] sm:$0xff]
  %v983 = vld [vmem:[%s973 + $0x48] sm:$0xff]
  %v984 = vld [vmem:[%s973 + $0x50] sm:$0xff]
  %v985 = vld [vmem:[%s973 + $0x58] sm:$0xff]
  %v986 = vld [vmem:[%s973 + $0x60] sm:$0xff]
  %v987 = vld [vmem:[%s973 + $0x68] sm:$0xff]
  %v988 = vld [vmem:[%s973 + $0x70] sm:$0xff]
  %v989 = vld [vmem:[%s973 + $0x78] sm:$0xff]
  %s990 = scalar_lea.vmem %s4, 1
  %v991 = vld [vmem:[%s990] sm:$0x1]
  %v993 = vlaneseq
  %v994 = vshrl.u32 %v993, 7
  %v995 = vsub.s32 0, %v994
  %v996 = vrot.slane %v991, %v995
  %998 = vmatprep.subr.mxu0 0.0
  %999 = vmatpush1.msra.mxu0 %v989
  %1000 = vmatprep.subr.mxu0 0.0
  %1001 = vmatpush1.msra.mxu0 %v988
  %1002 = vmatprep.subr.mxu0 0.0
  %1003 = vmatpush1.msra.mxu0 %v987
  %1004 = vmatprep.subr.mxu0 0.0
  %1005 = vmatpush1.msra.mxu0 %v986
  %1006 = vmatprep.subr.mxu0 0.0
  %1007 = vmatpush1.msra.mxu0 %v985
  %1008 = vmatprep.subr.mxu0 0.0
  %1009 = vmatpush1.msra.mxu0 %v984
  %1010 = vmatprep.subr.mxu0 0.0
  %1011 = vmatpush1.msra.mxu0 %v983
  %1012 = vmatprep.subr.mxu0 0.0
  %1013 = vmatpush1.msra.mxu0 %v982
  %1014 = vmatprep.subr.mxu0 0.0
  %1015 = vmatpush1.msra.mxu0 %v981
  %1016 = vmatprep.subr.mxu0 0.0
  %1017 = vmatpush1.msra.mxu0 %v980
  %1018 = vmatprep.subr.mxu0 0.0
  %1019 = vmatpush1.msra.mxu0 %v979
  %1020 = vmatprep.subr.mxu0 0.0
  %1021 = vmatpush1.msra.mxu0 %v978
  %1022 = vmatprep.subr.mxu0 0.0
  %1023 = vmatpush1.msra.mxu0 %v977
  %1024 = vmatprep.subr.mxu0 0.0
  %1025 = vmatpush1.msra.mxu0 %v976
  %1026 = vmatprep.subr.mxu0 0.0
  %1027 = vmatpush1.msra.mxu0 %v975
  %1028 = vmatprep.subr.mxu0 0.0
  %1029 = vmatpush1.msra.mxu0 %v974
  %1030 = vmatprep.subr.mxu0 0.0
  %1031 = vmatpush2.msra.mxu0 0.0
  %1032 = vmatprep.subr.mxu0 0.0
  %1033 = vmatpush2.msra.mxu0 0.0
  %1034 = vmatprep.subr.mxu0 0.0
  %1035 = vmatpush2.msra.mxu0 0.0
  %1036 = vmatprep.subr.mxu0 0.0
  %1037 = vmatpush2.msra.mxu0 0.0
  %1038 = vmatprep.subr.mxu0 0.0
  %1039 = vmatpush2.msra.mxu0 0.0
  %1040 = vmatprep.subr.mxu0 0.0
  %1041 = vmatpush2.msra.mxu0 0.0
  %1042 = vmatprep.subr.mxu0 0.0
  %1043 = vmatpush2.msra.mxu0 0.0
  %1044 = vmatprep.subr.mxu0 0.0
  %1045 = vmatpush2.msra.mxu0 0.0
  %1046 = vmatprep.subr.mxu0 0.0
  %1047 = vmatpush2.msra.mxu0 0.0
  %1048 = vmatprep.subr.mxu0 0.0
  %1049 = vmatpush2.msra.mxu0 0.0
  %1050 = vmatprep.subr.mxu0 0.0
  %1051 = vmatpush2.msra.mxu0 0.0
  %1052 = vmatprep.subr.mxu0 0.0
  %1053 = vmatpush2.msra.mxu0 0.0
  %1054 = vmatprep.subr.mxu0 0.0
  %1055 = vmatpush2.msra.mxu0 0.0
  %1056 = vmatprep.subr.mxu0 0.0
  %1057 = vmatpush2.msra.mxu0 0.0
  %1058 = vmatprep.subr.mxu0 0.0
  %1059 = vmatpush2.msra.mxu0 0.0
  %1060 = vmatprep.subr.mxu0 0.0
  %1061 = vmatpush2.msra.mxu0 0.0
  %1062 = vmatprep.mubr.f32.mxu0 0.0
  %1063 = vmatmul.mubr.f32.gmra.mxu0 %v965
  %v1064 = vpop.f32.mrf.mxu0
  %v1065 = vadd.f32 %v996, %v1064
  %v1066 = vpop.f32.mrf.mxu0
  %1067 = vmatprep.mubr.f32.mxu0 0.0
  %1068 = vmatmul.mubr.f32.gmra.mxu0 %v966
  %v1069 = vpop.f32.mrf.mxu0
  %v1070 = vadd.f32 %v996, %v1069
  %v1071 = vpop.f32.mrf.mxu0
  %1072 = vmatprep.mubr.f32.mxu0 0.0
  %1073 = vmatmul.mubr.f32.gmra.mxu0 %v967
  %v1074 = vpop.f32.mrf.mxu0
  %v1075 = vadd.f32 %v996, %v1074
  %v1076 = vpop.f32.mrf.mxu0
  %1077 = vmatprep.mubr.f32.mxu0 0.0
  %1078 = vmatmul.mubr.f32.gmra.mxu0 %v968
  %v1079 = vpop.f32.mrf.mxu0
  %v1080 = vadd.f32 %v996, %v1079
  %v1081 = vpop.f32.mrf.mxu0
  %1082 = vmatprep.mubr.f32.mxu0 0.0
  %1083 = vmatmul.mubr.f32.gmra.mxu0 %v969
  %v1084 = vpop.f32.mrf.mxu0
  %v1085 = vadd.f32 %v996, %v1084
  %v1086 = vpop.f32.mrf.mxu0
  %1087 = vmatprep.mubr.f32.mxu0 0.0
  %1088 = vmatmul.mubr.f32.gmra.mxu0 %v970
  %v1089 = vpop.f32.mrf.mxu0
  %v1090 = vadd.f32 %v996, %v1089
  %v1091 = vpop.f32.mrf.mxu0
  %1092 = vmatprep.mubr.f32.mxu0 0.0
  %1093 = vmatmul.mubr.f32.gmra.mxu0 %v971
  %v1094 = vpop.f32.mrf.mxu0
  %v1095 = vadd.f32 %v996, %v1094
  %v1096 = vpop.f32.mrf.mxu0
  %1097 = vmatprep.mubr.f32.mxu0 0.0
  %1098 = vmatmul.mubr.f32.gmra.mxu0 %v972
  %v1099 = vpop.f32.mrf.mxu0
  %v1100 = vadd.f32 %v996, %v1099
  %v1101 = vpop.f32.mrf.mxu0
  %1102 = vdwg.mxu0
  %1103 = vst [vmem:[#allocation3] sm:$0xff] %v1065
  %1104 = vst [vmem:[#allocation3 + $0x8] sm:$0xff] %v1070
  %1105 = vst [vmem:[#allocation3 + $0x10] sm:$0xff] %v1075
  %1106 = vst [vmem:[#allocation3 + $0x18] sm:$0xff] %v1080
  %1107 = vst [vmem:[#allocation3 + $0x20] sm:$0xff] %v1085
  %1108 = vst [vmem:[#allocation3 + $0x28] sm:$0xff] %v1090
  %1109 = vst [vmem:[#allocation3 + $0x30] sm:$0xff] %v1095
  %1110 = vst [vmem:[#allocation3 + $0x38] sm:$0xff] %v1100
  %s1111 = scalar_lea.vmem %s3, 128
  %v1112 = vld [vmem:[%s1111] sm:$0xff]
  %v1113 = vld [vmem:[%s1111 + $0x8] sm:$0xff]
  %v1114 = vld [vmem:[%s1111 + $0x10] sm:$0xff]
  %v1115 = vld [vmem:[%s1111 + $0x18] sm:$0xff]
  %v1116 = vld [vmem:[%s1111 + $0x20] sm:$0xff]
  %v1117 = vld [vmem:[%s1111 + $0x28] sm:$0xff]
  %v1118 = vld [vmem:[%s1111 + $0x30] sm:$0xff]
  %v1119 = vld [vmem:[%s1111 + $0x38] sm:$0xff]
  %v1120 = vld [vmem:[%s1111 + $0x40] sm:$0xff]
  %v1121 = vld [vmem:[%s1111 + $0x48] sm:$0xff]
  %v1122 = vld [vmem:[%s1111 + $0x50] sm:$0xff]
  %v1123 = vld [vmem:[%s1111 + $0x58] sm:$0xff]
  %v1124 = vld [vmem:[%s1111 + $0x60] sm:$0xff]
  %v1125 = vld [vmem:[%s1111 + $0x68] sm:$0xff]
  %v1126 = vld [vmem:[%s1111 + $0x70] sm:$0xff]
  %v1127 = vld [vmem:[%s1111 + $0x78] sm:$0xff]
  %v1128 = vld [vmem:[#allocation3] sm:$0xff]
  %1129 = vmatprep.subr.mxu0 0.0
  %1130 = vmatpush1.msra.mxu0 %v1127
  %1131 = vmatprep.subr.mxu0 0.0
  %1132 = vmatpush1.msra.mxu0 %v1126
  %1133 = vmatprep.subr.mxu0 0.0
  %1134 = vmatpush1.msra.mxu0 %v1125
  %1135 = vmatprep.subr.mxu0 0.0
  %1136 = vmatpush1.msra.mxu0 %v1124
  %1137 = vmatprep.subr.mxu0 0.0
  %1138 = vmatpush1.msra.mxu0 %v1123
  %1139 = vmatprep.subr.mxu0 0.0
  %1140 = vmatpush1.msra.mxu0 %v1122
  %1141 = vmatprep.subr.mxu0 0.0
  %1142 = vmatpush1.msra.mxu0 %v1121
  %1143 = vmatprep.subr.mxu0 0.0
  %1144 = vmatpush1.msra.mxu0 %v1120
  %1145 = vmatprep.subr.mxu0 0.0
  %1146 = vmatpush1.msra.mxu0 %v1119
  %1147 = vmatprep.subr.mxu0 0.0
  %1148 = vmatpush1.msra.mxu0 %v1118
  %1149 = vmatprep.subr.mxu0 0.0
  %1150 = vmatpush1.msra.mxu0 %v1117
  %1151 = vmatprep.subr.mxu0 0.0
  %1152 = vmatpush1.msra.mxu0 %v1116
  %1153 = vmatprep.subr.mxu0 0.0
  %1154 = vmatpush1.msra.mxu0 %v1115
  %1155 = vmatprep.subr.mxu0 0.0
  %1156 = vmatpush1.msra.mxu0 %v1114
  %1157 = vmatprep.subr.mxu0 0.0
  %1158 = vmatpush1.msra.mxu0 %v1113
  %1159 = vmatprep.subr.mxu0 0.0
  %1160 = vmatpush1.msra.mxu0 %v1112
  %1161 = vmatprep.subr.mxu0 0.0
  %1162 = vmatpush2.msra.mxu0 0.0
  %1163 = vmatprep.subr.mxu0 0.0
  %1164 = vmatpush2.msra.mxu0 0.0
  %1165 = vmatprep.subr.mxu0 0.0
  %1166 = vmatpush2.msra.mxu0 0.0
  %1167 = vmatprep.subr.mxu0 0.0
  %1168 = vmatpush2.msra.mxu0 0.0
  %1169 = vmatprep.subr.mxu0 0.0
  %1170 = vmatpush2.msra.mxu0 0.0
  %1171 = vmatprep.subr.mxu0 0.0
  %1172 = vmatpush2.msra.mxu0 0.0
  %1173 = vmatprep.subr.mxu0 0.0
  %1174 = vmatpush2.msra.mxu0 0.0
  %1175 = vmatprep.subr.mxu0 0.0
  %1176 = vmatpush2.msra.mxu0 0.0
  %1177 = vmatprep.subr.mxu0 0.0
  %1178 = vmatpush2.msra.mxu0 0.0
  %1179 = vmatprep.subr.mxu0 0.0
  %1180 = vmatpush2.msra.mxu0 0.0
  %1181 = vmatprep.subr.mxu0 0.0
  %1182 = vmatpush2.msra.mxu0 0.0
  %1183 = vmatprep.subr.mxu0 0.0
  %1184 = vmatpush2.msra.mxu0 0.0
  %1185 = vmatprep.subr.mxu0 0.0
  %1186 = vmatpush2.msra.mxu0 0.0
  %1187 = vmatprep.subr.mxu0 0.0
  %1188 = vmatpush2.msra.mxu0 0.0
  %1189 = vmatprep.subr.mxu0 0.0
  %1190 = vmatpush2.msra.mxu0 0.0
  %1191 = vmatprep.subr.mxu0 0.0
  %1192 = vmatpush2.msra.mxu0 0.0
  %1193 = vmatprep.mubr.f32.mxu0 0.0
  %1194 = vmatmul.mubr.f32.gmra.mxu0 0.0
  %v1195 = vpop.f32.mrf.mxu0
  %v1196 = vadd.f32 0.0, %v1195
  %v1197 = vpop.f32.mrf.mxu0
  %1198 = vdwg.mxu0
  %v1199 = vadd.f32 %v1128, %v1196
  %v1200 = vtanh.pop %v1199
  %v1201 = vld [vmem:[#allocation3 + $0x8] sm:$0xff]
  %1202 = vmatprep.subr.mxu0 0.0
  %1203 = vmatpush1.msra.mxu0 %v1127
  %1204 = vmatprep.subr.mxu0 0.0
  %1205 = vmatpush1.msra.mxu0 %v1126
  %1206 = vmatprep.subr.mxu0 0.0
  %1207 = vmatpush1.msra.mxu0 %v1125
  %1208 = vmatprep.subr.mxu0 0.0
  %1209 = vmatpush1.msra.mxu0 %v1124
  %1210 = vmatprep.subr.mxu0 0.0
  %1211 = vmatpush1.msra.mxu0 %v1123
  %1212 = vmatprep.subr.mxu0 0.0
  %1213 = vmatpush1.msra.mxu0 %v1122
  %1214 = vmatprep.subr.mxu0 0.0
  %1215 = vmatpush1.msra.mxu0 %v1121
  %1216 = vmatprep.subr.mxu0 0.0
  %1217 = vmatpush1.msra.mxu0 %v1120
  %1218 = vmatprep.subr.mxu0 0.0
  %1219 = vmatpush1.msra.mxu0 %v1119
  %1220 = vmatprep.subr.mxu0 0.0
  %1221 = vmatpush1.msra.mxu0 %v1118
  %1222 = vmatprep.subr.mxu0 0.0
  %1223 = vmatpush1.msra.mxu0 %v1117
  %1224 = vmatprep.subr.mxu0 0.0
  %1225 = vmatpush1.msra.mxu0 %v1116
  %1226 = vmatprep.subr.mxu0 0.0
  %1227 = vmatpush1.msra.mxu0 %v1115
  %1228 = vmatprep.subr.mxu0 0.0
  %1229 = vmatpush1.msra.mxu0 %v1114
  %1230 = vmatprep.subr.mxu0 0.0
  %1231 = vmatpush1.msra.mxu0 %v1113
  %1232 = vmatprep.subr.mxu0 0.0
  %1233 = vmatpush1.msra.mxu0 %v1112
  %1234 = vmatprep.subr.mxu0 0.0
  %1235 = vmatpush2.msra.mxu0 0.0
  %1236 = vmatprep.subr.mxu0 0.0
  %1237 = vmatpush2.msra.mxu0 0.0
  %1238 = vmatprep.subr.mxu0 0.0
  %1239 = vmatpush2.msra.mxu0 0.0
  %1240 = vmatprep.subr.mxu0 0.0
  %1241 = vmatpush2.msra.mxu0 0.0
  %1242 = vmatprep.subr.mxu0 0.0
  %1243 = vmatpush2.msra.mxu0 0.0
  %1244 = vmatprep.subr.mxu0 0.0
  %1245 = vmatpush2.msra.mxu0 0.0
  %1246 = vmatprep.subr.mxu0 0.0
  %1247 = vmatpush2.msra.mxu0 0.0
  %1248 = vmatprep.subr.mxu0 0.0
  %1249 = vmatpush2.msra.mxu0 0.0
  %1250 = vmatprep.subr.mxu0 0.0
  %1251 = vmatpush2.msra.mxu0 0.0
  %1252 = vmatprep.subr.mxu0 0.0
  %1253 = vmatpush2.msra.mxu0 0.0
  %1254 = vmatprep.subr.mxu0 0.0
  %1255 = vmatpush2.msra.mxu0 0.0
  %1256 = vmatprep.subr.mxu0 0.0
  %1257 = vmatpush2.msra.mxu0 0.0
  %1258 = vmatprep.subr.mxu0 0.0
  %1259 = vmatpush2.msra.mxu0 0.0
  %1260 = vmatprep.subr.mxu0 0.0
  %1261 = vmatpush2.msra.mxu0 0.0
  %1262 = vmatprep.subr.mxu0 0.0
  %1263 = vmatpush2.msra.mxu0 0.0
  %1264 = vmatprep.subr.mxu0 0.0
  %1265 = vmatpush2.msra.mxu0 0.0
  %1266 = vmatprep.mubr.f32.mxu0 0.0
  %1267 = vmatmul.mubr.f32.gmra.mxu0 %v1200
  %v1268 = vpop.f32.mrf.mxu0
  %v1269 = vadd.f32 0.0, %v1268
  %v1270 = vpop.f32.mrf.mxu0
  %1271 = vdwg.mxu0
  %v1272 = vadd.f32 %v1201, %v1269
  %v1273 = vtanh.pop %v1272
  %v1274 = vld [vmem:[#allocation3 + $0x10] sm:$0xff]
  %1275 = vmatprep.subr.mxu0 0.0
  %1276 = vmatpush1.msra.mxu0 %v1127
  %1277 = vmatprep.subr.mxu0 0.0
  %1278 = vmatpush1.msra.mxu0 %v1126
  %1279 = vmatprep.subr.mxu0 0.0
  %1280 = vmatpush1.msra.mxu0 %v1125
  %1281 = vmatprep.subr.mxu0 0.0
  %1282 = vmatpush1.msra.mxu0 %v1124
  %1283 = vmatprep.subr.mxu0 0.0
  %1284 = vmatpush1.msra.mxu0 %v1123
  %1285 = vmatprep.subr.mxu0 0.0
  %1286 = vmatpush1.msra.mxu0 %v1122
  %1287 = vmatprep.subr.mxu0 0.0
  %1288 = vmatpush1.msra.mxu0 %v1121
  %1289 = vmatprep.subr.mxu0 0.0
  %1290 = vmatpush1.msra.mxu0 %v1120
  %1291 = vmatprep.subr.mxu0 0.0
  %1292 = vmatpush1.msra.mxu0 %v1119
  %1293 = vmatprep.subr.mxu0 0.0
  %1294 = vmatpush1.msra.mxu0 %v1118
  %1295 = vmatprep.subr.mxu0 0.0
  %1296 = vmatpush1.msra.mxu0 %v1117
  %1297 = vmatprep.subr.mxu0 0.0
  %1298 = vmatpush1.msra.mxu0 %v1116
  %1299 = vmatprep.subr.mxu0 0.0
  %1300 = vmatpush1.msra.mxu0 %v1115
  %1301 = vmatprep.subr.mxu0 0.0
  %1302 = vmatpush1.msra.mxu0 %v1114
  %1303 = vmatprep.subr.mxu0 0.0
  %1304 = vmatpush1.msra.mxu0 %v1113
  %1305 = vmatprep.subr.mxu0 0.0
  %1306 = vmatpush1.msra.mxu0 %v1112
  %1307 = vmatprep.subr.mxu0 0.0
  %1308 = vmatpush2.msra.mxu0 0.0
  %1309 = vmatprep.subr.mxu0 0.0
  %1310 = vmatpush2.msra.mxu0 0.0
  %1311 = vmatprep.subr.mxu0 0.0
  %1312 = vmatpush2.msra.mxu0 0.0
  %1313 = vmatprep.subr.mxu0 0.0
  %1314 = vmatpush2.msra.mxu0 0.0
  %1315 = vmatprep.subr.mxu0 0.0
  %1316 = vmatpush2.msra.mxu0 0.0
  %1317 = vmatprep.subr.mxu0 0.0
  %1318 = vmatpush2.msra.mxu0 0.0
  %1319 = vmatprep.subr.mxu0 0.0
  %1320 = vmatpush2.msra.mxu0 0.0
  %1321 = vmatprep.subr.mxu0 0.0
  %1322 = vmatpush2.msra.mxu0 0.0
  %1323 = vmatprep.subr.mxu0 0.0
  %1324 = vmatpush2.msra.mxu0 0.0
  %1325 = vmatprep.subr.mxu0 0.0
  %1326 = vmatpush2.msra.mxu0 0.0
  %1327 = vmatprep.subr.mxu0 0.0
  %1328 = vmatpush2.msra.mxu0 0.0
  %1329 = vmatprep.subr.mxu0 0.0
  %1330 = vmatpush2.msra.mxu0 0.0
  %1331 = vmatprep.subr.mxu0 0.0
  %1332 = vmatpush2.msra.mxu0 0.0
  %1333 = vmatprep.subr.mxu0 0.0
  %1334 = vmatpush2.msra.mxu0 0.0
  %1335 = vmatprep.subr.mxu0 0.0
  %1336 = vmatpush2.msra.mxu0 0.0
  %1337 = vmatprep.subr.mxu0 0.0
  %1338 = vmatpush2.msra.mxu0 0.0
  %1339 = vmatprep.mubr.f32.mxu0 0.0
  %1340 = vmatmul.mubr.f32.gmra.mxu0 %v1273
  %v1341 = vpop.f32.mrf.mxu0
  %v1342 = vadd.f32 0.0, %v1341
  %v1343 = vpop.f32.mrf.mxu0
  %1344 = vdwg.mxu0
  %v1345 = vadd.f32 %v1274, %v1342
  %v1346 = vtanh.pop %v1345
  %v1347 = vld [vmem:[#allocation3 + $0x18] sm:$0xff]
  %1348 = vmatprep.subr.mxu0 0.0
  %1349 = vmatpush1.msra.mxu0 %v1127
  %1350 = vmatprep.subr.mxu0 0.0
  %1351 = vmatpush1.msra.mxu0 %v1126
  %1352 = vmatprep.subr.mxu0 0.0
  %1353 = vmatpush1.msra.mxu0 %v1125
  %1354 = vmatprep.subr.mxu0 0.0
  %1355 = vmatpush1.msra.mxu0 %v1124
  %1356 = vmatprep.subr.mxu0 0.0
  %1357 = vmatpush1.msra.mxu0 %v1123
  %1358 = vmatprep.subr.mxu0 0.0
  %1359 = vmatpush1.msra.mxu0 %v1122
  %1360 = vmatprep.subr.mxu0 0.0
  %1361 = vmatpush1.msra.mxu0 %v1121
  %1362 = vmatprep.subr.mxu0 0.0
  %1363 = vmatpush1.msra.mxu0 %v1120
  %1364 = vmatprep.subr.mxu0 0.0
  %1365 = vmatpush1.msra.mxu0 %v1119
  %1366 = vmatprep.subr.mxu0 0.0
  %1367 = vmatpush1.msra.mxu0 %v1118
  %1368 = vmatprep.subr.mxu0 0.0
  %1369 = vmatpush1.msra.mxu0 %v1117
  %1370 = vmatprep.subr.mxu0 0.0
  %1371 = vmatpush1.msra.mxu0 %v1116
  %1372 = vmatprep.subr.mxu0 0.0
  %1373 = vmatpush1.msra.mxu0 %v1115
  %1374 = vmatprep.subr.mxu0 0.0
  %1375 = vmatpush1.msra.mxu0 %v1114
  %1376 = vmatprep.subr.mxu0 0.0
  %1377 = vmatpush1.msra.mxu0 %v1113
  %1378 = vmatprep.subr.mxu0 0.0
  %1379 = vmatpush1.msra.mxu0 %v1112
  %1380 = vmatprep.subr.mxu0 0.0
  %1381 = vmatpush2.msra.mxu0 0.0
  %1382 = vmatprep.subr.mxu0 0.0
  %1383 = vmatpush2.msra.mxu0 0.0
  %1384 = vmatprep.subr.mxu0 0.0
  %1385 = vmatpush2.msra.mxu0 0.0
  %1386 = vmatprep.subr.mxu0 0.0
  %1387 = vmatpush2.msra.mxu0 0.0
  %1388 = vmatprep.subr.mxu0 0.0
  %1389 = vmatpush2.msra.mxu0 0.0
  %1390 = vmatprep.subr.mxu0 0.0
  %1391 = vmatpush2.msra.mxu0 0.0
  %1392 = vmatprep.subr.mxu0 0.0
  %1393 = vmatpush2.msra.mxu0 0.0
  %1394 = vmatprep.subr.mxu0 0.0
  %1395 = vmatpush2.msra.mxu0 0.0
  %1396 = vmatprep.subr.mxu0 0.0
  %1397 = vmatpush2.msra.mxu0 0.0
  %1398 = vmatprep.subr.mxu0 0.0
  %1399 = vmatpush2.msra.mxu0 0.0
  %1400 = vmatprep.subr.mxu0 0.0
  %1401 = vmatpush2.msra.mxu0 0.0
  %1402 = vmatprep.subr.mxu0 0.0
  %1403 = vmatpush2.msra.mxu0 0.0
  %1404 = vmatprep.subr.mxu0 0.0
  %1405 = vmatpush2.msra.mxu0 0.0
  %1406 = vmatprep.subr.mxu0 0.0
  %1407 = vmatpush2.msra.mxu0 0.0
  %1408 = vmatprep.subr.mxu0 0.0
  %1409 = vmatpush2.msra.mxu0 0.0
  %1410 = vmatprep.subr.mxu0 0.0
  %1411 = vmatpush2.msra.mxu0 0.0
  %1412 = vmatprep.mubr.f32.mxu0 0.0
  %1413 = vmatmul.mubr.f32.gmra.mxu0 %v1346
  %v1414 = vpop.f32.mrf.mxu0
  %v1415 = vadd.f32 0.0, %v1414
  %v1416 = vpop.f32.mrf.mxu0
  %1417 = vdwg.mxu0
  %v1418 = vadd.f32 %v1347, %v1415
  %v1419 = vtanh.pop %v1418
  %v1420 = vld [vmem:[#allocation3 + $0x20] sm:$0xff]
  %1421 = vmatprep.subr.mxu0 0.0
  %1422 = vmatpush1.msra.mxu0 %v1127
  %1423 = vmatprep.subr.mxu0 0.0
  %1424 = vmatpush1.msra.mxu0 %v1126
  %1425 = vmatprep.subr.mxu0 0.0
  %1426 = vmatpush1.msra.mxu0 %v1125
  %1427 = vmatprep.subr.mxu0 0.0
  %1428 = vmatpush1.msra.mxu0 %v1124
  %1429 = vmatprep.subr.mxu0 0.0
  %1430 = vmatpush1.msra.mxu0 %v1123
  %1431 = vmatprep.subr.mxu0 0.0
  %1432 = vmatpush1.msra.mxu0 %v1122
  %1433 = vmatprep.subr.mxu0 0.0
  %1434 = vmatpush1.msra.mxu0 %v1121
  %1435 = vmatprep.subr.mxu0 0.0
  %1436 = vmatpush1.msra.mxu0 %v1120
  %1437 = vmatprep.subr.mxu0 0.0
  %1438 = vmatpush1.msra.mxu0 %v1119
  %1439 = vmatprep.subr.mxu0 0.0
  %1440 = vmatpush1.msra.mxu0 %v1118
  %1441 = vmatprep.subr.mxu0 0.0
  %1442 = vmatpush1.msra.mxu0 %v1117
  %1443 = vmatprep.subr.mxu0 0.0
  %1444 = vmatpush1.msra.mxu0 %v1116
  %1445 = vmatprep.subr.mxu0 0.0
  %1446 = vmatpush1.msra.mxu0 %v1115
  %1447 = vmatprep.subr.mxu0 0.0
  %1448 = vmatpush1.msra.mxu0 %v1114
  %1449 = vmatprep.subr.mxu0 0.0
  %1450 = vmatpush1.msra.mxu0 %v1113
  %1451 = vmatprep.subr.mxu0 0.0
  %1452 = vmatpush1.msra.mxu0 %v1112
  %1453 = vmatprep.subr.mxu0 0.0
  %1454 = vmatpush2.msra.mxu0 0.0
  %1455 = vmatprep.subr.mxu0 0.0
  %1456 = vmatpush2.msra.mxu0 0.0
  %1457 = vmatprep.subr.mxu0 0.0
  %1458 = vmatpush2.msra.mxu0 0.0
  %1459 = vmatprep.subr.mxu0 0.0
  %1460 = vmatpush2.msra.mxu0 0.0
  %1461 = vmatprep.subr.mxu0 0.0
  %1462 = vmatpush2.msra.mxu0 0.0
  %1463 = vmatprep.subr.mxu0 0.0
  %1464 = vmatpush2.msra.mxu0 0.0
  %1465 = vmatprep.subr.mxu0 0.0
  %1466 = vmatpush2.msra.mxu0 0.0
  %1467 = vmatprep.subr.mxu0 0.0
  %1468 = vmatpush2.msra.mxu0 0.0
  %1469 = vmatprep.subr.mxu0 0.0
  %1470 = vmatpush2.msra.mxu0 0.0
  %1471 = vmatprep.subr.mxu0 0.0
  %1472 = vmatpush2.msra.mxu0 0.0
  %1473 = vmatprep.subr.mxu0 0.0
  %1474 = vmatpush2.msra.mxu0 0.0
  %1475 = vmatprep.subr.mxu0 0.0
  %1476 = vmatpush2.msra.mxu0 0.0
  %1477 = vmatprep.subr.mxu0 0.0
  %1478 = vmatpush2.msra.mxu0 0.0
  %1479 = vmatprep.subr.mxu0 0.0
  %1480 = vmatpush2.msra.mxu0 0.0
  %1481 = vmatprep.subr.mxu0 0.0
  %1482 = vmatpush2.msra.mxu0 0.0
  %1483 = vmatprep.subr.mxu0 0.0
  %1484 = vmatpush2.msra.mxu0 0.0
  %1485 = vmatprep.mubr.f32.mxu0 0.0
  %1486 = vmatmul.mubr.f32.gmra.mxu0 %v1419
  %v1487 = vpop.f32.mrf.mxu0
  %v1488 = vadd.f32 0.0, %v1487
  %v1489 = vpop.f32.mrf.mxu0
  %1490 = vdwg.mxu0
  %v1491 = vadd.f32 %v1420, %v1488
  %v1492 = vtanh.pop %v1491
  %v1493 = vld [vmem:[#allocation3 + $0x28] sm:$0xff]
  %1494 = vmatprep.subr.mxu0 0.0
  %1495 = vmatpush1.msra.mxu0 %v1127
  %1496 = vmatprep.subr.mxu0 0.0
  %1497 = vmatpush1.msra.mxu0 %v1126
  %1498 = vmatprep.subr.mxu0 0.0
  %1499 = vmatpush1.msra.mxu0 %v1125
  %1500 = vmatprep.subr.mxu0 0.0
  %1501 = vmatpush1.msra.mxu0 %v1124
  %1502 = vmatprep.subr.mxu0 0.0
  %1503 = vmatpush1.msra.mxu0 %v1123
  %1504 = vmatprep.subr.mxu0 0.0
  %1505 = vmatpush1.msra.mxu0 %v1122
  %1506 = vmatprep.subr.mxu0 0.0
  %1507 = vmatpush1.msra.mxu0 %v1121
  %1508 = vmatprep.subr.mxu0 0.0
  %1509 = vmatpush1.msra.mxu0 %v1120
  %1510 = vmatprep.subr.mxu0 0.0
  %1511 = vmatpush1.msra.mxu0 %v1119
  %1512 = vmatprep.subr.mxu0 0.0
  %1513 = vmatpush1.msra.mxu0 %v1118
  %1514 = vmatprep.subr.mxu0 0.0
  %1515 = vmatpush1.msra.mxu0 %v1117
  %1516 = vmatprep.subr.mxu0 0.0
  %1517 = vmatpush1.msra.mxu0 %v1116
  %1518 = vmatprep.subr.mxu0 0.0
  %1519 = vmatpush1.msra.mxu0 %v1115
  %1520 = vmatprep.subr.mxu0 0.0
  %1521 = vmatpush1.msra.mxu0 %v1114
  %1522 = vmatprep.subr.mxu0 0.0
  %1523 = vmatpush1.msra.mxu0 %v1113
  %1524 = vmatprep.subr.mxu0 0.0
  %1525 = vmatpush1.msra.mxu0 %v1112
  %1526 = vmatprep.subr.mxu0 0.0
  %1527 = vmatpush2.msra.mxu0 0.0
  %1528 = vmatprep.subr.mxu0 0.0
  %1529 = vmatpush2.msra.mxu0 0.0
  %1530 = vmatprep.subr.mxu0 0.0
  %1531 = vmatpush2.msra.mxu0 0.0
  %1532 = vmatprep.subr.mxu0 0.0
  %1533 = vmatpush2.msra.mxu0 0.0
  %1534 = vmatprep.subr.mxu0 0.0
  %1535 = vmatpush2.msra.mxu0 0.0
  %1536 = vmatprep.subr.mxu0 0.0
  %1537 = vmatpush2.msra.mxu0 0.0
  %1538 = vmatprep.subr.mxu0 0.0
  %1539 = vmatpush2.msra.mxu0 0.0
  %1540 = vmatprep.subr.mxu0 0.0
  %1541 = vmatpush2.msra.mxu0 0.0
  %1542 = vmatprep.subr.mxu0 0.0
  %1543 = vmatpush2.msra.mxu0 0.0
  %1544 = vmatprep.subr.mxu0 0.0
  %1545 = vmatpush2.msra.mxu0 0.0
  %1546 = vmatprep.subr.mxu0 0.0
  %1547 = vmatpush2.msra.mxu0 0.0
  %1548 = vmatprep.subr.mxu0 0.0
  %1549 = vmatpush2.msra.mxu0 0.0
  %1550 = vmatprep.subr.mxu0 0.0
  %1551 = vmatpush2.msra.mxu0 0.0
  %1552 = vmatprep.subr.mxu0 0.0
  %1553 = vmatpush2.msra.mxu0 0.0
  %1554 = vmatprep.subr.mxu0 0.0
  %1555 = vmatpush2.msra.mxu0 0.0
  %1556 = vmatprep.subr.mxu0 0.0
  %1557 = vmatpush2.msra.mxu0 0.0
  %1558 = vmatprep.mubr.f32.mxu0 0.0
  %1559 = vmatmul.mubr.f32.gmra.mxu0 %v1492
  %v1560 = vpop.f32.mrf.mxu0
  %v1561 = vadd.f32 0.0, %v1560
  %v1562 = vpop.f32.mrf.mxu0
  %1563 = vdwg.mxu0
  %v1564 = vadd.f32 %v1493, %v1561
  %v1565 = vtanh.pop %v1564
  %v1566 = vld [vmem:[#allocation3 + $0x30] sm:$0xff]
  %1567 = vmatprep.subr.mxu0 0.0
  %1568 = vmatpush1.msra.mxu0 %v1127
  %1569 = vmatprep.subr.mxu0 0.0
  %1570 = vmatpush1.msra.mxu0 %v1126
  %1571 = vmatprep.subr.mxu0 0.0
  %1572 = vmatpush1.msra.mxu0 %v1125
  %1573 = vmatprep.subr.mxu0 0.0
  %1574 = vmatpush1.msra.mxu0 %v1124
  %1575 = vmatprep.subr.mxu0 0.0
  %1576 = vmatpush1.msra.mxu0 %v1123
  %1577 = vmatprep.subr.mxu0 0.0
  %1578 = vmatpush1.msra.mxu0 %v1122
  %1579 = vmatprep.subr.mxu0 0.0
  %1580 = vmatpush1.msra.mxu0 %v1121
  %1581 = vmatprep.subr.mxu0 0.0
  %1582 = vmatpush1.msra.mxu0 %v1120
  %1583 = vmatprep.subr.mxu0 0.0
  %1584 = vmatpush1.msra.mxu0 %v1119
  %1585 = vmatprep.subr.mxu0 0.0
  %1586 = vmatpush1.msra.mxu0 %v1118
  %1587 = vmatprep.subr.mxu0 0.0
  %1588 = vmatpush1.msra.mxu0 %v1117
  %1589 = vmatprep.subr.mxu0 0.0
  %1590 = vmatpush1.msra.mxu0 %v1116
  %1591 = vmatprep.subr.mxu0 0.0
  %1592 = vmatpush1.msra.mxu0 %v1115
  %1593 = vmatprep.subr.mxu0 0.0
  %1594 = vmatpush1.msra.mxu0 %v1114
  %1595 = vmatprep.subr.mxu0 0.0
  %1596 = vmatpush1.msra.mxu0 %v1113
  %1597 = vmatprep.subr.mxu0 0.0
  %1598 = vmatpush1.msra.mxu0 %v1112
  %1599 = vmatprep.subr.mxu0 0.0
  %1600 = vmatpush2.msra.mxu0 0.0
  %1601 = vmatprep.subr.mxu0 0.0
  %1602 = vmatpush2.msra.mxu0 0.0
  %1603 = vmatprep.subr.mxu0 0.0
  %1604 = vmatpush2.msra.mxu0 0.0
  %1605 = vmatprep.subr.mxu0 0.0
  %1606 = vmatpush2.msra.mxu0 0.0
  %1607 = vmatprep.subr.mxu0 0.0
  %1608 = vmatpush2.msra.mxu0 0.0
  %1609 = vmatprep.subr.mxu0 0.0
  %1610 = vmatpush2.msra.mxu0 0.0
  %1611 = vmatprep.subr.mxu0 0.0
  %1612 = vmatpush2.msra.mxu0 0.0
  %1613 = vmatprep.subr.mxu0 0.0
  %1614 = vmatpush2.msra.mxu0 0.0
  %1615 = vmatprep.subr.mxu0 0.0
  %1616 = vmatpush2.msra.mxu0 0.0
  %1617 = vmatprep.subr.mxu0 0.0
  %1618 = vmatpush2.msra.mxu0 0.0
  %1619 = vmatprep.subr.mxu0 0.0
  %1620 = vmatpush2.msra.mxu0 0.0
  %1621 = vmatprep.subr.mxu0 0.0
  %1622 = vmatpush2.msra.mxu0 0.0
  %1623 = vmatprep.subr.mxu0 0.0
  %1624 = vmatpush2.msra.mxu0 0.0
  %1625 = vmatprep.subr.mxu0 0.0
  %1626 = vmatpush2.msra.mxu0 0.0
  %1627 = vmatprep.subr.mxu0 0.0
  %1628 = vmatpush2.msra.mxu0 0.0
  %1629 = vmatprep.subr.mxu0 0.0
  %1630 = vmatpush2.msra.mxu0 0.0
  %1631 = vmatprep.mubr.f32.mxu0 0.0
  %1632 = vmatmul.mubr.f32.gmra.mxu0 %v1565
  %v1633 = vpop.f32.mrf.mxu0
  %v1634 = vadd.f32 0.0, %v1633
  %v1635 = vpop.f32.mrf.mxu0
  %1636 = vdwg.mxu0
  %v1637 = vadd.f32 %v1566, %v1634
  %v1638 = vtanh.pop %v1637
  %v1639 = vld [vmem:[#allocation3 + $0x38] sm:$0xff]
  %1640 = vmatprep.subr.mxu0 0.0
  %1641 = vmatpush1.msra.mxu0 %v1127
  %1642 = vmatprep.subr.mxu0 0.0
  %1643 = vmatpush1.msra.mxu0 %v1126
  %1644 = vmatprep.subr.mxu0 0.0
  %1645 = vmatpush1.msra.mxu0 %v1125
  %1646 = vmatprep.subr.mxu0 0.0
  %1647 = vmatpush1.msra.mxu0 %v1124
  %1648 = vmatprep.subr.mxu0 0.0
  %1649 = vmatpush1.msra.mxu0 %v1123
  %1650 = vmatprep.subr.mxu0 0.0
  %1651 = vmatpush1.msra.mxu0 %v1122
  %1652 = vmatprep.subr.mxu0 0.0
  %1653 = vmatpush1.msra.mxu0 %v1121
  %1654 = vmatprep.subr.mxu0 0.0
  %1655 = vmatpush1.msra.mxu0 %v1120
  %1656 = vmatprep.subr.mxu0 0.0
  %1657 = vmatpush1.msra.mxu0 %v1119
  %1658 = vmatprep.subr.mxu0 0.0
  %1659 = vmatpush1.msra.mxu0 %v1118
  %1660 = vmatprep.subr.mxu0 0.0
  %1661 = vmatpush1.msra.mxu0 %v1117
  %1662 = vmatprep.subr.mxu0 0.0
  %1663 = vmatpush1.msra.mxu0 %v1116
  %1664 = vmatprep.subr.mxu0 0.0
  %1665 = vmatpush1.msra.mxu0 %v1115
  %1666 = vmatprep.subr.mxu0 0.0
  %1667 = vmatpush1.msra.mxu0 %v1114
  %1668 = vmatprep.subr.mxu0 0.0
  %1669 = vmatpush1.msra.mxu0 %v1113
  %1670 = vmatprep.subr.mxu0 0.0
  %1671 = vmatpush1.msra.mxu0 %v1112
  %1672 = vmatprep.subr.mxu0 0.0
  %1673 = vmatpush2.msra.mxu0 0.0
  %1674 = vmatprep.subr.mxu0 0.0
  %1675 = vmatpush2.msra.mxu0 0.0
  %1676 = vmatprep.subr.mxu0 0.0
  %1677 = vmatpush2.msra.mxu0 0.0
  %1678 = vmatprep.subr.mxu0 0.0
  %1679 = vmatpush2.msra.mxu0 0.0
  %1680 = vmatprep.subr.mxu0 0.0
  %1681 = vmatpush2.msra.mxu0 0.0
  %1682 = vmatprep.subr.mxu0 0.0
  %1683 = vmatpush2.msra.mxu0 0.0
  %1684 = vmatprep.subr.mxu0 0.0
  %1685 = vmatpush2.msra.mxu0 0.0
  %1686 = vmatprep.subr.mxu0 0.0
  %1687 = vmatpush2.msra.mxu0 0.0
  %1688 = vmatprep.subr.mxu0 0.0
  %1689 = vmatpush2.msra.mxu0 0.0
  %1690 = vmatprep.subr.mxu0 0.0
  %1691 = vmatpush2.msra.mxu0 0.0
  %1692 = vmatprep.subr.mxu0 0.0
  %1693 = vmatpush2.msra.mxu0 0.0
  %1694 = vmatprep.subr.mxu0 0.0
  %1695 = vmatpush2.msra.mxu0 0.0
  %1696 = vmatprep.subr.mxu0 0.0
  %1697 = vmatpush2.msra.mxu0 0.0
  %1698 = vmatprep.subr.mxu0 0.0
  %1699 = vmatpush2.msra.mxu0 0.0
  %1700 = vmatprep.subr.mxu0 0.0
  %1701 = vmatpush2.msra.mxu0 0.0
  %1702 = vmatprep.subr.mxu0 0.0
  %1703 = vmatpush2.msra.mxu0 0.0
  %1704 = vmatprep.mubr.f32.mxu0 0.0
  %1705 = vmatmul.mubr.f32.gmra.mxu0 %v1638
  %v1706 = vpop.f32.mrf.mxu0
  %v1707 = vadd.f32 0.0, %v1706
  %v1708 = vpop.f32.mrf.mxu0
  %1709 = vdwg.mxu0
  %v1710 = vadd.f32 %v1639, %v1707
  %v1711 = vtanh.pop %v1710
  %v1712 = vld [vmem:[%s5] sm:$0xff]
  %v1713 = vld [vmem:[%s5 + $0x8] sm:$0xff]
  %v1714 = vld [vmem:[%s5 + $0x10] sm:$0xff]
  %v1715 = vld [vmem:[%s5 + $0x18] sm:$0xff]
  %v1716 = vld [vmem:[%s5 + $0x20] sm:$0xff]
  %v1717 = vld [vmem:[%s5 + $0x28] sm:$0xff]
  %v1718 = vld [vmem:[%s5 + $0x30] sm:$0xff]
  %v1719 = vld [vmem:[%s5 + $0x38] sm:$0xff]
  %v1720 = vld [vmem:[%s5 + $0x40] sm:$0xff]
  %v1721 = vld [vmem:[%s5 + $0x48] sm:$0xff]
  %v1722 = vld [vmem:[%s5 + $0x50] sm:$0xff]
  %v1723 = vld [vmem:[%s5 + $0x58] sm:$0xff]
  %v1724 = vld [vmem:[%s5 + $0x60] sm:$0xff]
  %v1725 = vld [vmem:[%s5 + $0x68] sm:$0xff]
  %v1726 = vld [vmem:[%s5 + $0x70] sm:$0xff]
  %v1727 = vld [vmem:[%s5 + $0x78] sm:$0xff]
  %v1728 = vld [vmem:[%s6] sm:$0x1]
  %v1730 = vlaneseq
  %v1731 = vshrl.u32 %v1730, 7
  %v1732 = vsub.s32 0, %v1731
  %v1733 = vrot.slane %v1728, %v1732
  %1735 = vmatprep.subr.mxu0 0.0
  %1736 = vmatpush1.msra.mxu0 %v1727
  %1737 = vmatprep.subr.mxu0 0.0
  %1738 = vmatpush1.msra.mxu0 %v1726
  %1739 = vmatprep.subr.mxu0 0.0
  %1740 = vmatpush1.msra.mxu0 %v1725
  %1741 = vmatprep.subr.mxu0 0.0
  %1742 = vmatpush1.msra.mxu0 %v1724
  %1743 = vmatprep.subr.mxu0 0.0
  %1744 = vmatpush1.msra.mxu0 %v1723
  %1745 = vmatprep.subr.mxu0 0.0
  %1746 = vmatpush1.msra.mxu0 %v1722
  %1747 = vmatprep.subr.mxu0 0.0
  %1748 = vmatpush1.msra.mxu0 %v1721
  %1749 = vmatprep.subr.mxu0 0.0
  %1750 = vmatpush1.msra.mxu0 %v1720
  %1751 = vmatprep.subr.mxu0 0.0
  %1752 = vmatpush1.msra.mxu0 %v1719
  %1753 = vmatprep.subr.mxu0 0.0
  %1754 = vmatpush1.msra.mxu0 %v1718
  %1755 = vmatprep.subr.mxu0 0.0
  %1756 = vmatpush1.msra.mxu0 %v1717
  %1757 = vmatprep.subr.mxu0 0.0
  %1758 = vmatpush1.msra.mxu0 %v1716
  %1759 = vmatprep.subr.mxu0 0.0
  %1760 = vmatpush1.msra.mxu0 %v1715
  %1761 = vmatprep.subr.mxu0 0.0
  %1762 = vmatpush1.msra.mxu0 %v1714
  %1763 = vmatprep.subr.mxu0 0.0
  %1764 = vmatpush1.msra.mxu0 %v1713
  %1765 = vmatprep.subr.mxu0 0.0
  %1766 = vmatpush1.msra.mxu0 %v1712
  %1767 = vmatprep.subr.mxu0 0.0
  %1768 = vmatpush2.msra.mxu0 0.0
  %1769 = vmatprep.subr.mxu0 0.0
  %1770 = vmatpush2.msra.mxu0 0.0
  %1771 = vmatprep.subr.mxu0 0.0
  %1772 = vmatpush2.msra.mxu0 0.0
  %1773 = vmatprep.subr.mxu0 0.0
  %1774 = vmatpush2.msra.mxu0 0.0
  %1775 = vmatprep.subr.mxu0 0.0
  %1776 = vmatpush2.msra.mxu0 0.0
  %1777 = vmatprep.subr.mxu0 0.0
  %1778 = vmatpush2.msra.mxu0 0.0
  %1779 = vmatprep.subr.mxu0 0.0
  %1780 = vmatpush2.msra.mxu0 0.0
  %1781 = vmatprep.subr.mxu0 0.0
  %1782 = vmatpush2.msra.mxu0 0.0
  %1783 = vmatprep.subr.mxu0 0.0
  %1784 = vmatpush2.msra.mxu0 0.0
  %1785 = vmatprep.subr.mxu0 0.0
  %1786 = vmatpush2.msra.mxu0 0.0
  %1787 = vmatprep.subr.mxu0 0.0
  %1788 = vmatpush2.msra.mxu0 0.0
  %1789 = vmatprep.subr.mxu0 0.0
  %1790 = vmatpush2.msra.mxu0 0.0
  %1791 = vmatprep.subr.mxu0 0.0
  %1792 = vmatpush2.msra.mxu0 0.0
  %1793 = vmatprep.subr.mxu0 0.0
  %1794 = vmatpush2.msra.mxu0 0.0
  %1795 = vmatprep.subr.mxu0 0.0
  %1796 = vmatpush2.msra.mxu0 0.0
  %1797 = vmatprep.subr.mxu0 0.0
  %1798 = vmatpush2.msra.mxu0 0.0
  %1799 = vmatprep.mubr.f32.mxu0 0.0
  %1800 = vmatmul.mubr.f32.gmra.mxu0 %v1711
  %v1801 = vpop.f32.mrf.mxu0
  %v1802 = vadd.f32 %v1733, %v1801
  %v1803 = vpop.f32.mrf.mxu0
  %1804 = vdwg.mxu0
  %vm1805 = vcmp.lt.s32.totalorder %v27, 5
  %v1806 = vsel %vm1805, %v1802, -1e+30
  %1807 = vmax.xlane.f32.xlu0 %v1806
  %v1808 = vpop.xlane.xlu0 %1807
  %v1809 = vsub.f32 %v1806, %v1808
  %v1810 = vmul.f32 %v1809, 1.442695
  %v1811 = vpow.pop %v1810
  %1812 = vadd.xlane.f32.xlu0 %v1811
  %v1813 = vpop.xlane.xlu0 %1812
  %v1814 = vrcp.pop %v1813
  %v1815 = vmul.f32 %v1811, %v1814
  %1816 = vst [vmem:[%s7] sm:$0xff] %v1815
  // Predicated region
  $region30: #{rnn_model_forward.1} parent=0 // pred_check
    _
  $region31: #{rnn_model_forward.1} parent=0 // pred_check_branch
    %1818 = sbr.rel (0) target = $region33
  $region32: #{rnn_model_forward.1} parent=0 // pred_region
    _
  $region33: #{rnn_model_forward.1} parent=0 // pred_fallthru
    _
  // Predicated region
  $region34: #{rnn_model_forward.1} parent=0 // pred_check
    _
  $region35: #{rnn_model_forward.1} parent=0 // pred_check_branch
    %1820 = sbr.rel (0) target = $region37
  $region36: #{rnn_model_forward.1} parent=0 // pred_region
    _
  $region37: #{rnn_model_forward.1} parent=0 // pred_fallthru
    _

</llo_original>
